<compile_context>
chip_gen: v5e
topology: v5e:2x2
jax: 0.10.0
libtpu: 0.0.40
codegen_flags: <defaults>
</compile_context>

<pallas_src>
import math
import functools

import jax
import jax.numpy as jnp
from jax.experimental import pallas as pl
from jax.experimental.pallas import tpu as pltpu

# ---------------- model hyper-parameters (small, synthetic) ----------------
VOCAB = 100      # vocab size
MAXLEN = 64      # tokenizer max_length (positions available)
B = 2            # batch
S = 8            # padded sequence length of this batch
H = 32           # hidden size  (text_emb_dim)
NH = 4           # attention heads
DH = H // NH     # head dim
F = 64           # FFN intermediate size
L = 2            # number of encoder layers
LN_EPS = 1e-12   # BERT layer-norm eps


# ------------------------------ Pallas kernel ------------------------------
def encoder_kernel(
    x_ref,        # (B*S, H)   summed embeddings, batch folded on sublanes
    mask_ref,     # (B, 1, S)  attention mask (1.0 real / 0.0 pad)
    lnemb_ref,    # (2, H)     embedding LayerNorm [gamma; beta]
    wqkv_ref,     # (L, H, 3H) fused Q/K/V projection weights
    bqkv_ref,     # (L, 1, 3H) fused Q/K/V biases
    wo_ref,       # (L, H, H)  attention output projection
    w1_ref,       # (L, H, F)  FFN up projection
    b1_ref,       # (L, 1, F)
    w2_ref,       # (L, F, H)  FFN down projection
    vec_ref,      # (L, 6, H)  rows: [bo, ln1_g, ln1_b, b2, ln2_g, ln2_b]
    out_ref,      # (B, H)     pooled CLS hidden state
    *, batch, seq,
):
  bs = batch * seq
  h = x_ref[...]                                    # (BS, H)
  neg3 = (1.0 - mask_ref[...]) * (-1e9)             # (B, 1, S) additive key mask

  def layer_norm(t, g, b):
    mu = jnp.mean(t, axis=-1, keepdims=True)
    d = t - mu
    var = jnp.mean(d * d, axis=-1, keepdims=True)
    return d * jax.lax.rsqrt(var + LN_EPS) * g + b

  # Embedding LayerNorm
  h = layer_norm(h, lnemb_ref[0:1, :], lnemb_ref[1:2, :])

  inv_sqrt_dh = 1.0 / math.sqrt(DH)

  for l in range(L):                                # static unroll over layers
    vec = vec_ref[l]                                # (6, H)

    # ---- fused QKV projection: one (BS,H) x (H,3H) MXU matmul ----
    qkv = (jnp.dot(h, wqkv_ref[l], preferred_element_type=jnp.float32)
           + bqkv_ref[l])                           # (BS, 3H)

    # ---- multi-head self-attention: batch handled by 3-D einsums ----
    ctx_heads = []
    for hd in range(NH):                            # static unroll over heads
      lo = hd * DH
      q3 = qkv[:, lo:lo + DH].reshape(batch, seq, DH)              # (B,S,DH)
      k3 = qkv[:, H + lo:H + lo + DH].reshape(batch, seq, DH)      # (B,S,DH)
      v3 = qkv[:, 2 * H + lo:2 * H + lo + DH].reshape(batch, seq, DH)

      sc = (jnp.einsum('bqd,bkd->bqk', q3, k3,
                       preferred_element_type=jnp.float32) * inv_sqrt_dh
            + neg3)                                                 # (B,S,S)
      sc = sc - jnp.max(sc, axis=-1, keepdims=True)
      p = jnp.exp(sc)
      p = p * pl.reciprocal(jnp.sum(p, axis=-1, keepdims=True), approx=True)
      ctx3 = jnp.einsum('bqk,bkd->bqd', p, v3,
                        preferred_element_type=jnp.float32)         # (B,S,DH)
      ctx_heads.append(ctx3.reshape(bs, DH))
    ctx = jnp.concatenate(ctx_heads, axis=-1)                       # (BS, H)

    attn_out = (jnp.dot(ctx, wo_ref[l], preferred_element_type=jnp.float32)
                + vec[0:1, :])                                      # + bo
    h = layer_norm(h + attn_out, vec[1:2, :], vec[2:3, :])          # ln1

    # ---- feed-forward ----
    ff = jnp.dot(h, w1_ref[l], preferred_element_type=jnp.float32) + b1_ref[l]
    # TODO(synk): HF BERT uses exact erf-GELU; tanh approximation kept (tiny
    # numerical difference, guaranteed Mosaic lowering).
    ff = jax.nn.gelu(ff, approximate=True)
    ff = (jnp.dot(ff, w2_ref[l], preferred_element_type=jnp.float32)
          + vec[3:4, :])                                            # + b2
    h = layer_norm(h + ff, vec[4:5, :], vec[5:6, :])                # ln2

  # ---- CLS pooling: row b*seq of each batch element -> (B, H) ----
  cls = jnp.concatenate([h[b * seq:b * seq + 1, :] for b in range(batch)],
                        axis=0)
  out_ref[...] = cls.astype(out_ref.dtype)


# ------------------------------ wrapper -------------------------------------
def _full_spec(shape):
  n = len(shape)
  return pl.BlockSpec(shape, lambda i, _n=n: (0,) * _n)


def frozen_text_encoder_forward(token_ids, attention_mask, params):
  """token_ids: (B, S) int32, attention_mask: (B, S) float32.
  Returns (B, H) pooled CLS embedding (== last_hidden_state[:, 0])."""
  Bb, Ss = token_ids.shape

  # ---- embedding lookup (glue: gather has no tidy BlockSpec form) ----
  word = params["word_emb"][token_ids]                   # (B, S, H)
  pos = params["pos_emb"][:Ss][None, :, :]               # (1, S, H)
  typ = params["type_emb"][0][None, None, :]             # (1, 1, H)
  x_emb = (word + pos + typ).astype(jnp.float32).reshape(Bb * Ss, H)

  mask3 = attention_mask.reshape(Bb, 1, Ss).astype(jnp.float32)

  args = [
      x_emb, mask3,
      params["ln_emb"],
      params["wqkv"], params["bqkv"], params["wo"],
      params["w1"], params["b1"], params["w2"],
      params["vec"],
  ]

  cls = pl.pallas_call(
      functools.partial(encoder_kernel, batch=Bb, seq=Ss),
      out_shape=jax.ShapeDtypeStruct((Bb, H), jnp.float32),
      grid_spec=pltpu.PrefetchScalarGridSpec(
          num_scalar_prefetch=0,
          grid=(1,),                                 # single step: no per-batch
          in_specs=[_full_spec(a.shape) for a in args],
          out_specs=pl.BlockSpec((Bb, H), lambda i: (0, 0)),
      ),
      compiler_params=pltpu.CompilerParams(
          dimension_semantics=("arbitrary",)),
  )(*args)
  return cls


# ------------------------- deterministic params ------------------------------
def init_params(key):
  ks = jax.random.split(key, 12)
  s = 0.02
  ln_emb = jnp.concatenate([jnp.ones((1, H), jnp.float32),
                            jnp.zeros((1, H), jnp.float32)], axis=0)
  # vec rows: [bo, ln1_g, ln1_b, b2, ln2_g, ln2_b]  per layer
  one_layer_vec = jnp.stack([
      jnp.zeros((H,), jnp.float32),   # bo
      jnp.ones((H,), jnp.float32),    # ln1_g
      jnp.zeros((H,), jnp.float32),   # ln1_b
      jnp.zeros((H,), jnp.float32),   # b2
      jnp.ones((H,), jnp.float32),    # ln2_g
      jnp.zeros((H,), jnp.float32),   # ln2_b
  ], axis=0)                                           # (6, H)
  p = {
      "word_emb": jax.random.normal(ks[0], (VOCAB, H), jnp.float32) * s,
      "pos_emb":  jax.random.normal(ks[1], (MAXLEN, H), jnp.float32) * s,
      "type_emb": jax.random.normal(ks[2], (2, H), jnp.float32) * s,
      "ln_emb": ln_emb,                                            # (2, H)
      "wqkv": jax.random.normal(ks[3], (L, H, 3 * H), jnp.float32) * s,
      "bqkv": jnp.zeros((L, 1, 3 * H), jnp.float32),
      "wo":   jax.random.normal(ks[4], (L, H, H), jnp.float32) * s,
      "w1":   jax.random.normal(ks[5], (L, H, F), jnp.float32) * s,
      "b1":   jnp.zeros((L, 1, F), jnp.float32),
      "w2":   jax.random.normal(ks[6], (L, F, H), jnp.float32) * s,
      "vec":  jnp.tile(one_layer_vec[None, :, :], (L, 1, 1)),      # (L, 6, H)
  }
  return p


if __name__ == "__main__":
  key = jax.random.PRNGKey(0)
  pkey, tkey = jax.random.split(key)
  params = init_params(pkey)

  # TODO(synk): real HF tokenizer (string -> ids) has no Pallas equivalent;
  # emulate its output with deterministic token ids (CLS=1 at position 0) and
  # a padding mask.
  token_ids = jax.random.randint(tkey, (B, S), 2, VOCAB, dtype=jnp.int32)
  token_ids = token_ids.at[:, 0].set(1)                   # [CLS]
  attention_mask = jnp.ones((B, S), jnp.float32)
  attention_mask = attention_mask.at[1, S - 3:].set(0.0)  # second example padded
  token_ids = jnp.where(attention_mask > 0, token_ids, 0)  # [PAD] id = 0

  emb = frozen_text_encoder_forward(token_ids, attention_mask, params)
  emb = jax.block_until_ready(emb)
  assert emb.shape == (B, H) and emb.dtype == jnp.float32
  assert bool(jnp.all(jnp.isfinite(emb)))
  print("KERNEL_OK")
</pallas_src>

<mosaic_0001>
module attributes {stable_mosaic.version = 11 : i64} {
  func.func @encoder_kernel(%arg0: i32, %arg1: memref<16x32xf32, #tpu.memory_space<vmem>>, %arg2: memref<2x1x8xf32, #tpu.memory_space<vmem>>, %arg3: memref<2x32xf32, #tpu.memory_space<vmem>>, %arg4: memref<2x32x96xf32, #tpu.memory_space<vmem>>, %arg5: memref<2x1x96xf32, #tpu.memory_space<vmem>>, %arg6: memref<2x32x32xf32, #tpu.memory_space<vmem>>, %arg7: memref<2x32x64xf32, #tpu.memory_space<vmem>>, %arg8: memref<2x1x64xf32, #tpu.memory_space<vmem>>, %arg9: memref<2x64x32xf32, #tpu.memory_space<vmem>>, %arg10: memref<2x6x32xf32, #tpu.memory_space<vmem>>, %arg11: memref<2x32xf32, #tpu.memory_space<vmem>>) attributes {dimension_semantics = [#tpu.dimension_semantics<arbitrary>], iteration_bounds = array<i64: 1>, scalar_prefetch = 0 : i64, scratch_operands = 0 : i64, tpu.core_type = #tpu.core_type<tc>, window_params = [{pipeline_mode = #tpu.pipeline_mode<synchronous>, transform_indices = @transform_0, window_bounds = array<i64: 16, 32>}, {pipeline_mode = #tpu.pipeline_mode<synchronous>, transform_indices = @transform_1, window_bounds = array<i64: 2, 1, 8>}, {pipeline_mode = #tpu.pipeline_mode<synchronous>, transform_indices = @transform_2, window_bounds = array<i64: 2, 32>}, {pipeline_mode = #tpu.pipeline_mode<synchronous>, transform_indices = @transform_3, window_bounds = array<i64: 2, 32, 96>}, {pipeline_mode = #tpu.pipeline_mode<synchronous>, transform_indices = @transform_4, window_bounds = array<i64: 2, 1, 96>}, {pipeline_mode = #tpu.pipeline_mode<synchronous>, transform_indices = @transform_5, window_bounds = array<i64: 2, 32, 32>}, {pipeline_mode = #tpu.pipeline_mode<synchronous>, transform_indices = @transform_6, window_bounds = array<i64: 2, 32, 64>}, {pipeline_mode = #tpu.pipeline_mode<synchronous>, transform_indices = @transform_7, window_bounds = array<i64: 2, 1, 64>}, {pipeline_mode = #tpu.pipeline_mode<synchronous>, transform_indices = @transform_8, window_bounds = array<i64: 2, 64, 32>}, {pipeline_mode = #tpu.pipeline_mode<synchronous>, transform_indices = @transform_9, window_bounds = array<i64: 2, 6, 32>}, {pipeline_mode = #tpu.pipeline_mode<synchronous>, transform_indices = @transform_10, window_bounds = array<i64: 2, 32>}]} {
    %c0 = arith.constant 0 : index
    %c0_0 = arith.constant 0 : index
    %0 = vector.load %arg1[%c0, %c0_0] : memref<16x32xf32, #tpu.memory_space<vmem>>, vector<16x32xf32>
    %c0_1 = arith.constant 0 : index
    %c0_2 = arith.constant 0 : index
    %c0_3 = arith.constant 0 : index
    %1 = vector.load %arg2[%c0_1, %c0_2, %c0_3] : memref<2x1x8xf32, #tpu.memory_space<vmem>>, vector<2x1x8xf32>
    %cst = arith.constant 1.000000e+00 : f32
    %2 = vector.broadcast %cst : f32 to vector<2x1x8xf32>
    %3 = arith.subf %2, %1 : vector<2x1x8xf32>
    %cst_4 = arith.constant -1.000000e+09 : f32
    %4 = vector.broadcast %cst_4 : f32 to vector<2x1x8xf32>
    %5 = arith.mulf %3, %4 : vector<2x1x8xf32>
    %c0_5 = arith.constant 0 : index
    %c0_6 = arith.constant 0 : index
    %6 = vector.load %arg3[%c0_5, %c0_6] : memref<2x32xf32, #tpu.memory_space<vmem>>, vector<1x32xf32>
    %c1 = arith.constant 1 : index
    %c0_7 = arith.constant 0 : index
    %7 = vector.load %arg3[%c1, %c0_7] : memref<2x32xf32, #tpu.memory_space<vmem>>, vector<1x32xf32>
    %cst_8 = arith.constant dense<0.000000e+00> : vector<16xf32>
    %8 = vector.multi_reduction <add>, %0, %cst_8 [1] : vector<16x32xf32> to vector<16xf32>
    %9 = vector.shape_cast %8 : vector<16xf32> to vector<16x1xf32>
    %cst_9 = arith.constant 3.200000e+01 : f32
    %10 = vector.broadcast %cst_9 : f32 to vector<16x1xf32>
    %11 = arith.divf %9, %10 : vector<16x1xf32>
    %12 = vector.broadcast %11 : vector<16x1xf32> to vector<16x32xf32>
    %13 = arith.subf %0, %12 : vector<16x32xf32>
    %14 = arith.mulf %13, %13 : vector<16x32xf32>
    %cst_10 = arith.constant dense<0.000000e+00> : vector<16xf32>
    %15 = vector.multi_reduction <add>, %14, %cst_10 [1] : vector<16x32xf32> to vector<16xf32>
    %16 = vector.shape_cast %15 : vector<16xf32> to vector<16x1xf32>
    %cst_11 = arith.constant 3.200000e+01 : f32
    %17 = vector.broadcast %cst_11 : f32 to vector<16x1xf32>
    %18 = arith.divf %16, %17 : vector<16x1xf32>
    %cst_12 = arith.constant 9.99999996E-13 : f32
    %19 = vector.broadcast %cst_12 : f32 to vector<16x1xf32>
    %20 = arith.addf %18, %19 : vector<16x1xf32>
    %21 = math.rsqrt %20 : vector<16x1xf32>
    %22 = vector.broadcast %21 : vector<16x1xf32> to vector<16x32xf32>
    %23 = arith.mulf %13, %22 : vector<16x32xf32>
    %24 = vector.broadcast %6 : vector<1x32xf32> to vector<16x32xf32>
    %25 = arith.mulf %23, %24 : vector<16x32xf32>
    %26 = vector.broadcast %7 : vector<1x32xf32> to vector<16x32xf32>
    %27 = arith.addf %25, %26 : vector<16x32xf32>
    %c0_13 = arith.constant 0 : index
    %c0_14 = arith.constant 0 : index
    %c0_15 = arith.constant 0 : index
    %28 = vector.load %arg10[%c0_13, %c0_14, %c0_15] : memref<2x6x32xf32, #tpu.memory_space<vmem>>, vector<1x6x32xf32>
    %29 = vector.shape_cast %28 : vector<1x6x32xf32> to vector<6x32xf32>
    %c0_16 = arith.constant 0 : index
    %c0_17 = arith.constant 0 : index
    %c0_18 = arith.constant 0 : index
    %30 = vector.load %arg4[%c0_16, %c0_17, %c0_18] : memref<2x32x96xf32, #tpu.memory_space<vmem>>, vector<1x32x96xf32>
    %31 = vector.shape_cast %30 : vector<1x32x96xf32> to vector<32x96xf32>
    %cst_19 = arith.constant dense<0.000000e+00> : vector<16x96xf32>
    %32 = tpu.matmul %27, %31, %cst_19 {dimension_numbers = #tpu.dot_dimension_numbers<[1], [0], [0], [1], [0, 0, 1, 1], [], []>} : vector<16x32xf32>, vector<32x96xf32>, vector<16x96xf32> -> vector<16x96xf32>
    %c0_20 = arith.constant 0 : index
    %c0_21 = arith.constant 0 : index
    %c0_22 = arith.constant 0 : index
    %33 = vector.load %arg5[%c0_20, %c0_21, %c0_22] : memref<2x1x96xf32, #tpu.memory_space<vmem>>, vector<1x1x96xf32>
    %34 = vector.shape_cast %33 : vector<1x1x96xf32> to vector<1x96xf32>
    %35 = vector.broadcast %34 : vector<1x96xf32> to vector<16x96xf32>
    %36 = arith.addf %32, %35 : vector<16x96xf32>
    %37 = vector.extract_strided_slice %36 {offsets = [0, 0], sizes = [16, 8], strides = [1, 1]} : vector<16x96xf32> to vector<16x8xf32>
    %38 = vector.shape_cast %37 : vector<16x8xf32> to vector<2x8x8xf32>
    %39 = vector.extract_strided_slice %36 {offsets = [0, 32], sizes = [16, 8], strides = [1, 1]} : vector<16x96xf32> to vector<16x8xf32>
    %40 = vector.shape_cast %39 : vector<16x8xf32> to vector<2x8x8xf32>
    %41 = vector.extract_strided_slice %36 {offsets = [0, 64], sizes = [16, 8], strides = [1, 1]} : vector<16x96xf32> to vector<16x8xf32>
    %42 = vector.shape_cast %41 : vector<16x8xf32> to vector<2x8x8xf32>
    "tpu.trace_start"() <{level = 10 : i32, message = "bqd,bkd->bqk"}> : () -> ()
    %cst_23 = arith.constant dense<0.000000e+00> : vector<2x8x8xf32>
    %43 = tpu.matmul %38, %40, %cst_23 {dimension_numbers = #tpu.dot_dimension_numbers<[2], [2], [1], [1], [0, 0, 0, 1, 1, 1], [0], [0]>} : vector<2x8x8xf32>, vector<2x8x8xf32>, vector<2x8x8xf32> -> vector<2x8x8xf32>
    "tpu.trace_stop"() : () -> ()
    %cst_24 = arith.constant 0.353553385 : f32
    %44 = vector.broadcast %cst_24 : f32 to vector<2x8x8xf32>
    %45 = arith.mulf %43, %44 : vector<2x8x8xf32>
    %46 = vector.broadcast %5 : vector<2x1x8xf32> to vector<2x8x8xf32>
    %47 = arith.addf %45, %46 : vector<2x8x8xf32>
    %cst_25 = arith.constant dense<0xFF800000> : vector<2x8xf32>
    %48 = vector.multi_reduction <maximumf>, %47, %cst_25 [2] : vector<2x8x8xf32> to vector<2x8xf32>
    %49 = vector.shape_cast %48 : vector<2x8xf32> to vector<2x8x1xf32>
    %50 = vector.broadcast %49 : vector<2x8x1xf32> to vector<2x8x8xf32>
    %51 = arith.subf %47, %50 : vector<2x8x8xf32>
    %52 = math.exp %51 : vector<2x8x8xf32>
    %cst_26 = arith.constant dense<0.000000e+00> : vector<2x8xf32>
    %53 = vector.multi_reduction <add>, %52, %cst_26 [2] : vector<2x8x8xf32> to vector<2x8xf32>
    %54 = vector.shape_cast %53 : vector<2x8xf32> to vector<2x8x1xf32>
    %55 = tpu.reciprocal %54 {approx = true} : vector<2x8x1xf32> -> vector<2x8x1xf32>
    %56 = vector.broadcast %55 : vector<2x8x1xf32> to vector<2x8x8xf32>
    %57 = arith.mulf %52, %56 : vector<2x8x8xf32>
    "tpu.trace_start"() <{level = 10 : i32, message = "bqk,bkd->bqd"}> : () -> ()
    %cst_27 = arith.constant dense<0.000000e+00> : vector<2x8x8xf32>
    %58 = tpu.matmul %57, %42, %cst_27 {dimension_numbers = #tpu.dot_dimension_numbers<[2], [1], [1], [2], [0, 0, 0, 1, 1, 2], [0], [0]>} : vector<2x8x8xf32>, vector<2x8x8xf32>, vector<2x8x8xf32> -> vector<2x8x8xf32>
    "tpu.trace_stop"() : () -> ()
    %59 = vector.shape_cast %58 : vector<2x8x8xf32> to vector<16x8xf32>
    %60 = vector.extract_strided_slice %36 {offsets = [0, 8], sizes = [16, 8], strides = [1, 1]} : vector<16x96xf32> to vector<16x8xf32>
    %61 = vector.shape_cast %60 : vector<16x8xf32> to vector<2x8x8xf32>
    %62 = vector.extract_strided_slice %36 {offsets = [0, 40], sizes = [16, 8], strides = [1, 1]} : vector<16x96xf32> to vector<16x8xf32>
    %63 = vector.shape_cast %62 : vector<16x8xf32> to vector<2x8x8xf32>
    %64 = vector.extract_strided_slice %36 {offsets = [0, 72], sizes = [16, 8], strides = [1, 1]} : vector<16x96xf32> to vector<16x8xf32>
    %65 = vector.shape_cast %64 : vector<16x8xf32> to vector<2x8x8xf32>
    "tpu.trace_start"() <{level = 10 : i32, message = "bqd,bkd->bqk"}> : () -> ()
    %cst_28 = arith.constant dense<0.000000e+00> : vector<2x8x8xf32>
    %66 = tpu.matmul %61, %63, %cst_28 {dimension_numbers = #tpu.dot_dimension_numbers<[2], [2], [1], [1], [0, 0, 0, 1, 1, 1], [0], [0]>} : vector<2x8x8xf32>, vector<2x8x8xf32>, vector<2x8x8xf32> -> vector<2x8x8xf32>
    "tpu.trace_stop"() : () -> ()
    %cst_29 = arith.constant 0.353553385 : f32
    %67 = vector.broadcast %cst_29 : f32 to vector<2x8x8xf32>
    %68 = arith.mulf %66, %67 : vector<2x8x8xf32>
    %69 = vector.broadcast %5 : vector<2x1x8xf32> to vector<2x8x8xf32>
    %70 = arith.addf %68, %69 : vector<2x8x8xf32>
    %cst_30 = arith.constant dense<0xFF800000> : vector<2x8xf32>
    %71 = vector.multi_reduction <maximumf>, %70, %cst_30 [2] : vector<2x8x8xf32> to vector<2x8xf32>
    %72 = vector.shape_cast %71 : vector<2x8xf32> to vector<2x8x1xf32>
    %73 = vector.broadcast %72 : vector<2x8x1xf32> to vector<2x8x8xf32>
    %74 = arith.subf %70, %73 : vector<2x8x8xf32>
    %75 = math.exp %74 : vector<2x8x8xf32>
    %cst_31 = arith.constant dense<0.000000e+00> : vector<2x8xf32>
    %76 = vector.multi_reduction <add>, %75, %cst_31 [2] : vector<2x8x8xf32> to vector<2x8xf32>
    %77 = vector.shape_cast %76 : vector<2x8xf32> to vector<2x8x1xf32>
    %78 = tpu.reciprocal %77 {approx = true} : vector<2x8x1xf32> -> vector<2x8x1xf32>
    %79 = vector.broadcast %78 : vector<2x8x1xf32> to vector<2x8x8xf32>
    %80 = arith.mulf %75, %79 : vector<2x8x8xf32>
    "tpu.trace_start"() <{level = 10 : i32, message = "bqk,bkd->bqd"}> : () -> ()
    %cst_32 = arith.constant dense<0.000000e+00> : vector<2x8x8xf32>
    %81 = tpu.matmul %80, %65, %cst_32 {dimension_numbers = #tpu.dot_dimension_numbers<[2], [1], [1], [2], [0, 0, 0, 1, 1, 2], [0], [0]>} : vector<2x8x8xf32>, vector<2x8x8xf32>, vector<2x8x8xf32> -> vector<2x8x8xf32>
    "tpu.trace_stop"() : () -> ()
    %82 = vector.shape_cast %81 : vector<2x8x8xf32> to vector<16x8xf32>
    %83 = vector.extract_strided_slice %36 {offsets = [0, 16], sizes = [16, 8], strides = [1, 1]} : vector<16x96xf32> to vector<16x8xf32>
    %84 = vector.shape_cast %83 : vector<16x8xf32> to vector<2x8x8xf32>
    %85 = vector.extract_strided_slice %36 {offsets = [0, 48], sizes = [16, 8], strides = [1, 1]} : vector<16x96xf32> to vector<16x8xf32>
    %86 = vector.shape_cast %85 : vector<16x8xf32> to vector<2x8x8xf32>
    %87 = vector.extract_strided_slice %36 {offsets = [0, 80], sizes = [16, 8], strides = [1, 1]} : vector<16x96xf32> to vector<16x8xf32>
    %88 = vector.shape_cast %87 : vector<16x8xf32> to vector<2x8x8xf32>
    "tpu.trace_start"() <{level = 10 : i32, message = "bqd,bkd->bqk"}> : () -> ()
    %cst_33 = arith.constant dense<0.000000e+00> : vector<2x8x8xf32>
    %89 = tpu.matmul %84, %86, %cst_33 {dimension_numbers = #tpu.dot_dimension_numbers<[2], [2], [1], [1], [0, 0, 0, 1, 1, 1], [0], [0]>} : vector<2x8x8xf32>, vector<2x8x8xf32>, vector<2x8x8xf32> -> vector<2x8x8xf32>
    "tpu.trace_stop"() : () -> ()
    %cst_34 = arith.constant 0.353553385 : f32
    %90 = vector.broadcast %cst_34 : f32 to vector<2x8x8xf32>
    %91 = arith.mulf %89, %90 : vector<2x8x8xf32>
    %92 = vector.broadcast %5 : vector<2x1x8xf32> to vector<2x8x8xf32>
    %93 = arith.addf %91, %92 : vector<2x8x8xf32>
    %cst_35 = arith.constant dense<0xFF800000> : vector<2x8xf32>
    %94 = vector.multi_reduction <maximumf>, %93, %cst_35 [2] : vector<2x8x8xf32> to vector<2x8xf32>
    %95 = vector.shape_cast %94 : vector<2x8xf32> to vector<2x8x1xf32>
    %96 = vector.broadcast %95 : vector<2x8x1xf32> to vector<2x8x8xf32>
    %97 = arith.subf %93, %96 : vector<2x8x8xf32>
    %98 = math.exp %97 : vector<2x8x8xf32>
    %cst_36 = arith.constant dense<0.000000e+00> : vector<2x8xf32>
    %99 = vector.multi_reduction <add>, %98, %cst_36 [2] : vector<2x8x8xf32> to vector<2x8xf32>
    %100 = vector.shape_cast %99 : vector<2x8xf32> to vector<2x8x1xf32>
    %101 = tpu.reciprocal %100 {approx = true} : vector<2x8x1xf32> -> vector<2x8x1xf32>
    %102 = vector.broadcast %101 : vector<2x8x1xf32> to vector<2x8x8xf32>
    %103 = arith.mulf %98, %102 : vector<2x8x8xf32>
    "tpu.trace_start"() <{level = 10 : i32, message = "bqk,bkd->bqd"}> : () -> ()
    %cst_37 = arith.constant dense<0.000000e+00> : vector<2x8x8xf32>
    %104 = tpu.matmul %103, %88, %cst_37 {dimension_numbers = #tpu.dot_dimension_numbers<[2], [1], [1], [2], [0, 0, 0, 1, 1, 2], [0], [0]>} : vector<2x8x8xf32>, vector<2x8x8xf32>, vector<2x8x8xf32> -> vector<2x8x8xf32>
    "tpu.trace_stop"() : () -> ()
    %105 = vector.shape_cast %104 : vector<2x8x8xf32> to vector<16x8xf32>
    %106 = vector.extract_strided_slice %36 {offsets = [0, 24], sizes = [16, 8], strides = [1, 1]} : vector<16x96xf32> to vector<16x8xf32>
    %107 = vector.shape_cast %106 : vector<16x8xf32> to vector<2x8x8xf32>
    %108 = vector.extract_strided_slice %36 {offsets = [0, 56], sizes = [16, 8], strides = [1, 1]} : vector<16x96xf32> to vector<16x8xf32>
    %109 = vector.shape_cast %108 : vector<16x8xf32> to vector<2x8x8xf32>
    %110 = vector.extract_strided_slice %36 {offsets = [0, 88], sizes = [16, 8], strides = [1, 1]} : vector<16x96xf32> to vector<16x8xf32>
    %111 = vector.shape_cast %110 : vector<16x8xf32> to vector<2x8x8xf32>
    "tpu.trace_start"() <{level = 10 : i32, message = "bqd,bkd->bqk"}> : () -> ()
    %cst_38 = arith.constant dense<0.000000e+00> : vector<2x8x8xf32>
    %112 = tpu.matmul %107, %109, %cst_38 {dimension_numbers = #tpu.dot_dimension_numbers<[2], [2], [1], [1], [0, 0, 0, 1, 1, 1], [0], [0]>} : vector<2x8x8xf32>, vector<2x8x8xf32>, vector<2x8x8xf32> -> vector<2x8x8xf32>
    "tpu.trace_stop"() : () -> ()
    %cst_39 = arith.constant 0.353553385 : f32
    %113 = vector.broadcast %cst_39 : f32 to vector<2x8x8xf32>
    %114 = arith.mulf %112, %113 : vector<2x8x8xf32>
    %115 = vector.broadcast %5 : vector<2x1x8xf32> to vector<2x8x8xf32>
    %116 = arith.addf %114, %115 : vector<2x8x8xf32>
    %cst_40 = arith.constant dense<0xFF800000> : vector<2x8xf32>
    %117 = vector.multi_reduction <maximumf>, %116, %cst_40 [2] : vector<2x8x8xf32> to vector<2x8xf32>
    %118 = vector.shape_cast %117 : vector<2x8xf32> to vector<2x8x1xf32>
    %119 = vector.broadcast %118 : vector<2x8x1xf32> to vector<2x8x8xf32>
    %120 = arith.subf %116, %119 : vector<2x8x8xf32>
    %121 = math.exp %120 : vector<2x8x8xf32>
    %cst_41 = arith.constant dense<0.000000e+00> : vector<2x8xf32>
    %122 = vector.multi_reduction <add>, %121, %cst_41 [2] : vector<2x8x8xf32> to vector<2x8xf32>
    %123 = vector.shape_cast %122 : vector<2x8xf32> to vector<2x8x1xf32>
    %124 = tpu.reciprocal %123 {approx = true} : vector<2x8x1xf32> -> vector<2x8x1xf32>
    %125 = vector.broadcast %124 : vector<2x8x1xf32> to vector<2x8x8xf32>
    %126 = arith.mulf %121, %125 : vector<2x8x8xf32>
    "tpu.trace_start"() <{level = 10 : i32, message = "bqk,bkd->bqd"}> : () -> ()
    %cst_42 = arith.constant dense<0.000000e+00> : vector<2x8x8xf32>
    %127 = tpu.matmul %126, %111, %cst_42 {dimension_numbers = #tpu.dot_dimension_numbers<[2], [1], [1], [2], [0, 0, 0, 1, 1, 2], [0], [0]>} : vector<2x8x8xf32>, vector<2x8x8xf32>, vector<2x8x8xf32> -> vector<2x8x8xf32>
    "tpu.trace_stop"() : () -> ()
    %128 = vector.shape_cast %127 : vector<2x8x8xf32> to vector<16x8xf32>
    %129 = tpu.concatenate %59, %82, %105, %128 in 1 : vector<16x8xf32>, vector<16x8xf32>, vector<16x8xf32>, vector<16x8xf32> -> vector<16x32xf32>
    %c0_43 = arith.constant 0 : index
    %c0_44 = arith.constant 0 : index
    %c0_45 = arith.constant 0 : index
    %130 = vector.load %arg6[%c0_43, %c0_44, %c0_45] : memref<2x32x32xf32, #tpu.memory_space<vmem>>, vector<1x32x32xf32>
    %131 = vector.shape_cast %130 : vector<1x32x32xf32> to vector<32x32xf32>
    %cst_46 = arith.constant dense<0.000000e+00> : vector<16x32xf32>
    %132 = tpu.matmul %129, %131, %cst_46 {dimension_numbers = #tpu.dot_dimension_numbers<[1], [0], [0], [1], [0, 0, 1, 1], [], []>} : vector<16x32xf32>, vector<32x32xf32>, vector<16x32xf32> -> vector<16x32xf32>
    %133 = vector.extract_strided_slice %29 {offsets = [0, 0], sizes = [1, 32], strides = [1, 1]} : vector<6x32xf32> to vector<1x32xf32>
    %134 = vector.broadcast %133 : vector<1x32xf32> to vector<16x32xf32>
    %135 = arith.addf %132, %134 : vector<16x32xf32>
    %136 = arith.addf %27, %135 : vector<16x32xf32>
    %137 = vector.extract_strided_slice %29 {offsets = [1, 0], sizes = [1, 32], strides = [1, 1]} : vector<6x32xf32> to vector<1x32xf32>
    %138 = vector.extract_strided_slice %29 {offsets = [2, 0], sizes = [1, 32], strides = [1, 1]} : vector<6x32xf32> to vector<1x32xf32>
    %cst_47 = arith.constant dense<0.000000e+00> : vector<16xf32>
    %139 = vector.multi_reduction <add>, %136, %cst_47 [1] : vector<16x32xf32> to vector<16xf32>
    %140 = vector.shape_cast %139 : vector<16xf32> to vector<16x1xf32>
    %cst_48 = arith.constant 3.200000e+01 : f32
    %141 = vector.broadcast %cst_48 : f32 to vector<16x1xf32>
    %142 = arith.divf %140, %141 : vector<16x1xf32>
    %143 = vector.broadcast %142 : vector<16x1xf32> to vector<16x32xf32>
    %144 = arith.subf %136, %143 : vector<16x32xf32>
    %145 = arith.mulf %144, %144 : vector<16x32xf32>
    %cst_49 = arith.constant dense<0.000000e+00> : vector<16xf32>
    %146 = vector.multi_reduction <add>, %145, %cst_49 [1] : vector<16x32xf32> to vector<16xf32>
    %147 = vector.shape_cast %146 : vector<16xf32> to vector<16x1xf32>
    %cst_50 = arith.constant 3.200000e+01 : f32
    %148 = vector.broadcast %cst_50 : f32 to vector<16x1xf32>
    %149 = arith.divf %147, %148 : vector<16x1xf32>
    %cst_51 = arith.constant 9.99999996E-13 : f32
    %150 = vector.broadcast %cst_51 : f32 to vector<16x1xf32>
    %151 = arith.addf %149, %150 : vector<16x1xf32>
    %152 = math.rsqrt %151 : vector<16x1xf32>
    %153 = vector.broadcast %152 : vector<16x1xf32> to vector<16x32xf32>
    %154 = arith.mulf %144, %153 : vector<16x32xf32>
    %155 = vector.broadcast %137 : vector<1x32xf32> to vector<16x32xf32>
    %156 = arith.mulf %154, %155 : vector<16x32xf32>
    %157 = vector.broadcast %138 : vector<1x32xf32> to vector<16x32xf32>
    %158 = arith.addf %156, %157 : vector<16x32xf32>
    %c0_52 = arith.constant 0 : index
    %c0_53 = arith.constant 0 : index
    %c0_54 = arith.constant 0 : index
    %159 = vector.load %arg7[%c0_52, %c0_53, %c0_54] : memref<2x32x64xf32, #tpu.memory_space<vmem>>, vector<1x32x64xf32>
    %160 = vector.shape_cast %159 : vector<1x32x64xf32> to vector<32x64xf32>
    %cst_55 = arith.constant dense<0.000000e+00> : vector<16x64xf32>
    %161 = tpu.matmul %158, %160, %cst_55 {dimension_numbers = #tpu.dot_dimension_numbers<[1], [0], [0], [1], [0, 0, 1, 1], [], []>} : vector<16x32xf32>, vector<32x64xf32>, vector<16x64xf32> -> vector<16x64xf32>
    %c0_56 = arith.constant 0 : index
    %c0_57 = arith.constant 0 : index
    %c0_58 = arith.constant 0 : index
    %162 = vector.load %arg8[%c0_56, %c0_57, %c0_58] : memref<2x1x64xf32, #tpu.memory_space<vmem>>, vector<1x1x64xf32>
    %163 = vector.shape_cast %162 : vector<1x1x64xf32> to vector<1x64xf32>
    %164 = vector.broadcast %163 : vector<1x64xf32> to vector<16x64xf32>
    %165 = arith.addf %161, %164 : vector<16x64xf32>
    %166 = arith.mulf %165, %165 : vector<16x64xf32>
    %167 = arith.mulf %165, %166 : vector<16x64xf32>
    %cst_59 = arith.constant 4.471500e-02 : f32
    %168 = vector.broadcast %cst_59 : f32 to vector<16x64xf32>
    %169 = arith.mulf %168, %167 : vector<16x64xf32>
    %170 = arith.addf %165, %169 : vector<16x64xf32>
    %cst_60 = arith.constant 0.797884583 : f32
    %171 = vector.broadcast %cst_60 : f32 to vector<16x64xf32>
    %172 = arith.mulf %171, %170 : vector<16x64xf32>
    %173 = math.tanh %172 : vector<16x64xf32>
    %cst_61 = arith.constant 1.000000e+00 : f32
    %174 = vector.broadcast %cst_61 : f32 to vector<16x64xf32>
    %175 = arith.addf %174, %173 : vector<16x64xf32>
    %cst_62 = arith.constant 5.000000e-01 : f32
    %176 = vector.broadcast %cst_62 : f32 to vector<16x64xf32>
    %177 = arith.mulf %176, %175 : vector<16x64xf32>
    %178 = arith.mulf %165, %177 : vector<16x64xf32>
    %c0_63 = arith.constant 0 : index
    %c0_64 = arith.constant 0 : index
    %c0_65 = arith.constant 0 : index
    %179 = vector.load %arg9[%c0_63, %c0_64, %c0_65] : memref<2x64x32xf32, #tpu.memory_space<vmem>>, vector<1x64x32xf32>
    %180 = vector.shape_cast %179 : vector<1x64x32xf32> to vector<64x32xf32>
    %cst_66 = arith.constant dense<0.000000e+00> : vector<16x32xf32>
    %181 = tpu.matmul %178, %180, %cst_66 {dimension_numbers = #tpu.dot_dimension_numbers<[1], [0], [0], [1], [0, 0, 1, 1], [], []>} : vector<16x64xf32>, vector<64x32xf32>, vector<16x32xf32> -> vector<16x32xf32>
    %182 = vector.extract_strided_slice %29 {offsets = [3, 0], sizes = [1, 32], strides = [1, 1]} : vector<6x32xf32> to vector<1x32xf32>
    %183 = vector.broadcast %182 : vector<1x32xf32> to vector<16x32xf32>
    %184 = arith.addf %181, %183 : vector<16x32xf32>
    %185 = arith.addf %158, %184 : vector<16x32xf32>
    %186 = vector.extract_strided_slice %29 {offsets = [4, 0], sizes = [1, 32], strides = [1, 1]} : vector<6x32xf32> to vector<1x32xf32>
    %187 = vector.extract_strided_slice %29 {offsets = [5, 0], sizes = [1, 32], strides = [1, 1]} : vector<6x32xf32> to vector<1x32xf32>
    %cst_67 = arith.constant dense<0.000000e+00> : vector<16xf32>
    %188 = vector.multi_reduction <add>, %185, %cst_67 [1] : vector<16x32xf32> to vector<16xf32>
    %189 = vector.shape_cast %188 : vector<16xf32> to vector<16x1xf32>
    %cst_68 = arith.constant 3.200000e+01 : f32
    %190 = vector.broadcast %cst_68 : f32 to vector<16x1xf32>
    %191 = arith.divf %189, %190 : vector<16x1xf32>
    %192 = vector.broadcast %191 : vector<16x1xf32> to vector<16x32xf32>
    %193 = arith.subf %185, %192 : vector<16x32xf32>
    %194 = arith.mulf %193, %193 : vector<16x32xf32>
    %cst_69 = arith.constant dense<0.000000e+00> : vector<16xf32>
    %195 = vector.multi_reduction <add>, %194, %cst_69 [1] : vector<16x32xf32> to vector<16xf32>
    %196 = vector.shape_cast %195 : vector<16xf32> to vector<16x1xf32>
    %cst_70 = arith.constant 3.200000e+01 : f32
    %197 = vector.broadcast %cst_70 : f32 to vector<16x1xf32>
    %198 = arith.divf %196, %197 : vector<16x1xf32>
    %cst_71 = arith.constant 9.99999996E-13 : f32
    %199 = vector.broadcast %cst_71 : f32 to vector<16x1xf32>
    %200 = arith.addf %198, %199 : vector<16x1xf32>
    %201 = math.rsqrt %200 : vector<16x1xf32>
    %202 = vector.broadcast %201 : vector<16x1xf32> to vector<16x32xf32>
    %203 = arith.mulf %193, %202 : vector<16x32xf32>
    %204 = vector.broadcast %186 : vector<1x32xf32> to vector<16x32xf32>
    %205 = arith.mulf %203, %204 : vector<16x32xf32>
    %206 = vector.broadcast %187 : vector<1x32xf32> to vector<16x32xf32>
    %207 = arith.addf %205, %206 : vector<16x32xf32>
    %c1_72 = arith.constant 1 : index
    %c0_73 = arith.constant 0 : index
    %c0_74 = arith.constant 0 : index
    %208 = vector.load %arg10[%c1_72, %c0_73, %c0_74] : memref<2x6x32xf32, #tpu.memory_space<vmem>>, vector<1x6x32xf32>
    %209 = vector.shape_cast %208 : vector<1x6x32xf32> to vector<6x32xf32>
    %c1_75 = arith.constant 1 : index
    %c0_76 = arith.constant 0 : index
    %c0_77 = arith.constant 0 : index
    %210 = vector.load %arg4[%c1_75, %c0_76, %c0_77] : memref<2x32x96xf32, #tpu.memory_space<vmem>>, vector<1x32x96xf32>
    %211 = vector.shape_cast %210 : vector<1x32x96xf32> to vector<32x96xf32>
    %cst_78 = arith.constant dense<0.000000e+00> : vector<16x96xf32>
    %212 = tpu.matmul %207, %211, %cst_78 {dimension_numbers = #tpu.dot_dimension_numbers<[1], [0], [0], [1], [0, 0, 1, 1], [], []>} : vector<16x32xf32>, vector<32x96xf32>, vector<16x96xf32> -> vector<16x96xf32>
    %c1_79 = arith.constant 1 : index
    %c0_80 = arith.constant 0 : index
    %c0_81 = arith.constant 0 : index
    %213 = vector.load %arg5[%c1_79, %c0_80, %c0_81] : memref<2x1x96xf32, #tpu.memory_space<vmem>>, vector<1x1x96xf32>
    %214 = vector.shape_cast %213 : vector<1x1x96xf32> to vector<1x96xf32>
    %215 = vector.broadcast %214 : vector<1x96xf32> to vector<16x96xf32>
    %216 = arith.addf %212, %215 : vector<16x96xf32>
    %217 = vector.extract_strided_slice %216 {offsets = [0, 0], sizes = [16, 8], strides = [1, 1]} : vector<16x96xf32> to vector<16x8xf32>
    %218 = vector.shape_cast %217 : vector<16x8xf32> to vector<2x8x8xf32>
    %219 = vector.extract_strided_slice %216 {offsets = [0, 32], sizes = [16, 8], strides = [1, 1]} : vector<16x96xf32> to vector<16x8xf32>
    %220 = vector.shape_cast %219 : vector<16x8xf32> to vector<2x8x8xf32>
    %221 = vector.extract_strided_slice %216 {offsets = [0, 64], sizes = [16, 8], strides = [1, 1]} : vector<16x96xf32> to vector<16x8xf32>
    %222 = vector.shape_cast %221 : vector<16x8xf32> to vector<2x8x8xf32>
    "tpu.trace_start"() <{level = 10 : i32, message = "bqd,bkd->bqk"}> : () -> ()
    %cst_82 = arith.constant dense<0.000000e+00> : vector<2x8x8xf32>
    %223 = tpu.matmul %218, %220, %cst_82 {dimension_numbers = #tpu.dot_dimension_numbers<[2], [2], [1], [1], [0, 0, 0, 1, 1, 1], [0], [0]>} : vector<2x8x8xf32>, vector<2x8x8xf32>, vector<2x8x8xf32> -> vector<2x8x8xf32>
    "tpu.trace_stop"() : () -> ()
    %cst_83 = arith.constant 0.353553385 : f32
    %224 = vector.broadcast %cst_83 : f32 to vector<2x8x8xf32>
    %225 = arith.mulf %223, %224 : vector<2x8x8xf32>
    %226 = vector.broadcast %5 : vector<2x1x8xf32> to vector<2x8x8xf32>
    %227 = arith.addf %225, %226 : vector<2x8x8xf32>
    %cst_84 = arith.constant dense<0xFF800000> : vector<2x8xf32>
    %228 = vector.multi_reduction <maximumf>, %227, %cst_84 [2] : vector<2x8x8xf32> to vector<2x8xf32>
    %229 = vector.shape_cast %228 : vector<2x8xf32> to vector<2x8x1xf32>
    %230 = vector.broadcast %229 : vector<2x8x1xf32> to vector<2x8x8xf32>
    %231 = arith.subf %227, %230 : vector<2x8x8xf32>
    %232 = math.exp %231 : vector<2x8x8xf32>
    %cst_85 = arith.constant dense<0.000000e+00> : vector<2x8xf32>
    %233 = vector.multi_reduction <add>, %232, %cst_85 [2] : vector<2x8x8xf32> to vector<2x8xf32>
    %234 = vector.shape_cast %233 : vector<2x8xf32> to vector<2x8x1xf32>
    %235 = tpu.reciprocal %234 {approx = true} : vector<2x8x1xf32> -> vector<2x8x1xf32>
    %236 = vector.broadcast %235 : vector<2x8x1xf32> to vector<2x8x8xf32>
    %237 = arith.mulf %232, %236 : vector<2x8x8xf32>
    "tpu.trace_start"() <{level = 10 : i32, message = "bqk,bkd->bqd"}> : () -> ()
    %cst_86 = arith.constant dense<0.000000e+00> : vector<2x8x8xf32>
    %238 = tpu.matmul %237, %222, %cst_86 {dimension_numbers = #tpu.dot_dimension_numbers<[2], [1], [1], [2], [0, 0, 0, 1, 1, 2], [0], [0]>} : vector<2x8x8xf32>, vector<2x8x8xf32>, vector<2x8x8xf32> -> vector<2x8x8xf32>
    "tpu.trace_stop"() : () -> ()
    %239 = vector.shape_cast %238 : vector<2x8x8xf32> to vector<16x8xf32>
    %240 = vector.extract_strided_slice %216 {offsets = [0, 8], sizes = [16, 8], strides = [1, 1]} : vector<16x96xf32> to vector<16x8xf32>
    %241 = vector.shape_cast %240 : vector<16x8xf32> to vector<2x8x8xf32>
    %242 = vector.extract_strided_slice %216 {offsets = [0, 40], sizes = [16, 8], strides = [1, 1]} : vector<16x96xf32> to vector<16x8xf32>
    %243 = vector.shape_cast %242 : vector<16x8xf32> to vector<2x8x8xf32>
    %244 = vector.extract_strided_slice %216 {offsets = [0, 72], sizes = [16, 8], strides = [1, 1]} : vector<16x96xf32> to vector<16x8xf32>
    %245 = vector.shape_cast %244 : vector<16x8xf32> to vector<2x8x8xf32>
    "tpu.trace_start"() <{level = 10 : i32, message = "bqd,bkd->bqk"}> : () -> ()
    %cst_87 = arith.constant dense<0.000000e+00> : vector<2x8x8xf32>
    %246 = tpu.matmul %241, %243, %cst_87 {dimension_numbers = #tpu.dot_dimension_numbers<[2], [2], [1], [1], [0, 0, 0, 1, 1, 1], [0], [0]>} : vector<2x8x8xf32>, vector<2x8x8xf32>, vector<2x8x8xf32> -> vector<2x8x8xf32>
    "tpu.trace_stop"() : () -> ()
    %cst_88 = arith.constant 0.353553385 : f32
    %247 = vector.broadcast %cst_88 : f32 to vector<2x8x8xf32>
    %248 = arith.mulf %246, %247 : vector<2x8x8xf32>
    %249 = vector.broadcast %5 : vector<2x1x8xf32> to vector<2x8x8xf32>
    %250 = arith.addf %248, %249 : vector<2x8x8xf32>
    %cst_89 = arith.constant dense<0xFF800000> : vector<2x8xf32>
    %251 = vector.multi_reduction <maximumf>, %250, %cst_89 [2] : vector<2x8x8xf32> to vector<2x8xf32>
    %252 = vector.shape_cast %251 : vector<2x8xf32> to vector<2x8x1xf32>
    %253 = vector.broadcast %252 : vector<2x8x1xf32> to vector<2x8x8xf32>
    %254 = arith.subf %250, %253 : vector<2x8x8xf32>
    %255 = math.exp %254 : vector<2x8x8xf32>
    %cst_90 = arith.constant dense<0.000000e+00> : vector<2x8xf32>
    %256 = vector.multi_reduction <add>, %255, %cst_90 [2] : vector<2x8x8xf32> to vector<2x8xf32>
    %257 = vector.shape_cast %256 : vector<2x8xf32> to vector<2x8x1xf32>
    %258 = tpu.reciprocal %257 {approx = true} : vector<2x8x1xf32> -> vector<2x8x1xf32>
    %259 = vector.broadcast %258 : vector<2x8x1xf32> to vector<2x8x8xf32>
    %260 = arith.mulf %255, %259 : vector<2x8x8xf32>
    "tpu.trace_start"() <{level = 10 : i32, message = "bqk,bkd->bqd"}> : () -> ()
    %cst_91 = arith.constant dense<0.000000e+00> : vector<2x8x8xf32>
    %261 = tpu.matmul %260, %245, %cst_91 {dimension_numbers = #tpu.dot_dimension_numbers<[2], [1], [1], [2], [0, 0, 0, 1, 1, 2], [0], [0]>} : vector<2x8x8xf32>, vector<2x8x8xf32>, vector<2x8x8xf32> -> vector<2x8x8xf32>
    "tpu.trace_stop"() : () -> ()
    %262 = vector.shape_cast %261 : vector<2x8x8xf32> to vector<16x8xf32>
    %263 = vector.extract_strided_slice %216 {offsets = [0, 16], sizes = [16, 8], strides = [1, 1]} : vector<16x96xf32> to vector<16x8xf32>
    %264 = vector.shape_cast %263 : vector<16x8xf32> to vector<2x8x8xf32>
    %265 = vector.extract_strided_slice %216 {offsets = [0, 48], sizes = [16, 8], strides = [1, 1]} : vector<16x96xf32> to vector<16x8xf32>
    %266 = vector.shape_cast %265 : vector<16x8xf32> to vector<2x8x8xf32>
    %267 = vector.extract_strided_slice %216 {offsets = [0, 80], sizes = [16, 8], strides = [1, 1]} : vector<16x96xf32> to vector<16x8xf32>
    %268 = vector.shape_cast %267 : vector<16x8xf32> to vector<2x8x8xf32>
    "tpu.trace_start"() <{level = 10 : i32, message = "bqd,bkd->bqk"}> : () -> ()
    %cst_92 = arith.constant dense<0.000000e+00> : vector<2x8x8xf32>
    %269 = tpu.matmul %264, %266, %cst_92 {dimension_numbers = #tpu.dot_dimension_numbers<[2], [2], [1], [1], [0, 0, 0, 1, 1, 1], [0], [0]>} : vector<2x8x8xf32>, vector<2x8x8xf32>, vector<2x8x8xf32> -> vector<2x8x8xf32>
    "tpu.trace_stop"() : () -> ()
    %cst_93 = arith.constant 0.353553385 : f32
    %270 = vector.broadcast %cst_93 : f32 to vector<2x8x8xf32>
    %271 = arith.mulf %269, %270 : vector<2x8x8xf32>
    %272 = vector.broadcast %5 : vector<2x1x8xf32> to vector<2x8x8xf32>
    %273 = arith.addf %271, %272 : vector<2x8x8xf32>
    %cst_94 = arith.constant dense<0xFF800000> : vector<2x8xf32>
    %274 = vector.multi_reduction <maximumf>, %273, %cst_94 [2] : vector<2x8x8xf32> to vector<2x8xf32>
    %275 = vector.shape_cast %274 : vector<2x8xf32> to vector<2x8x1xf32>
    %276 = vector.broadcast %275 : vector<2x8x1xf32> to vector<2x8x8xf32>
    %277 = arith.subf %273, %276 : vector<2x8x8xf32>
    %278 = math.exp %277 : vector<2x8x8xf32>
    %cst_95 = arith.constant dense<0.000000e+00> : vector<2x8xf32>
    %279 = vector.multi_reduction <add>, %278, %cst_95 [2] : vector<2x8x8xf32> to vector<2x8xf32>
    %280 = vector.shape_cast %279 : vector<2x8xf32> to vector<2x8x1xf32>
    %281 = tpu.reciprocal %280 {approx = true} : vector<2x8x1xf32> -> vector<2x8x1xf32>
    %282 = vector.broadcast %281 : vector<2x8x1xf32> to vector<2x8x8xf32>
    %283 = arith.mulf %278, %282 : vector<2x8x8xf32>
    "tpu.trace_start"() <{level = 10 : i32, message = "bqk,bkd->bqd"}> : () -> ()
    %cst_96 = arith.constant dense<0.000000e+00> : vector<2x8x8xf32>
    %284 = tpu.matmul %283, %268, %cst_96 {dimension_numbers = #tpu.dot_dimension_numbers<[2], [1], [1], [2], [0, 0, 0, 1, 1, 2], [0], [0]>} : vector<2x8x8xf32>, vector<2x8x8xf32>, vector<2x8x8xf32> -> vector<2x8x8xf32>
    "tpu.trace_stop"() : () -> ()
    %285 = vector.shape_cast %284 : vector<2x8x8xf32> to vector<16x8xf32>
    %286 = vector.extract_strided_slice %216 {offsets = [0, 24], sizes = [16, 8], strides = [1, 1]} : vector<16x96xf32> to vector<16x8xf32>
    %287 = vector.shape_cast %286 : vector<16x8xf32> to vector<2x8x8xf32>
    %288 = vector.extract_strided_slice %216 {offsets = [0, 56], sizes = [16, 8], strides = [1, 1]} : vector<16x96xf32> to vector<16x8xf32>
    %289 = vector.shape_cast %288 : vector<16x8xf32> to vector<2x8x8xf32>
    %290 = vector.extract_strided_slice %216 {offsets = [0, 88], sizes = [16, 8], strides = [1, 1]} : vector<16x96xf32> to vector<16x8xf32>
    %291 = vector.shape_cast %290 : vector<16x8xf32> to vector<2x8x8xf32>
    "tpu.trace_start"() <{level = 10 : i32, message = "bqd,bkd->bqk"}> : () -> ()
    %cst_97 = arith.constant dense<0.000000e+00> : vector<2x8x8xf32>
    %292 = tpu.matmul %287, %289, %cst_97 {dimension_numbers = #tpu.dot_dimension_numbers<[2], [2], [1], [1], [0, 0, 0, 1, 1, 1], [0], [0]>} : vector<2x8x8xf32>, vector<2x8x8xf32>, vector<2x8x8xf32> -> vector<2x8x8xf32>
    "tpu.trace_stop"() : () -> ()
    %cst_98 = arith.constant 0.353553385 : f32
    %293 = vector.broadcast %cst_98 : f32 to vector<2x8x8xf32>
    %294 = arith.mulf %292, %293 : vector<2x8x8xf32>
    %295 = vector.broadcast %5 : vector<2x1x8xf32> to vector<2x8x8xf32>
    %296 = arith.addf %294, %295 : vector<2x8x8xf32>
    %cst_99 = arith.constant dense<0xFF800000> : vector<2x8xf32>
    %297 = vector.multi_reduction <maximumf>, %296, %cst_99 [2] : vector<2x8x8xf32> to vector<2x8xf32>
    %298 = vector.shape_cast %297 : vector<2x8xf32> to vector<2x8x1xf32>
    %299 = vector.broadcast %298 : vector<2x8x1xf32> to vector<2x8x8xf32>
    %300 = arith.subf %296, %299 : vector<2x8x8xf32>
    %301 = math.exp %300 : vector<2x8x8xf32>
    %cst_100 = arith.constant dense<0.000000e+00> : vector<2x8xf32>
    %302 = vector.multi_reduction <add>, %301, %cst_100 [2] : vector<2x8x8xf32> to vector<2x8xf32>
    %303 = vector.shape_cast %302 : vector<2x8xf32> to vector<2x8x1xf32>
    %304 = tpu.reciprocal %303 {approx = true} : vector<2x8x1xf32> -> vector<2x8x1xf32>
    %305 = vector.broadcast %304 : vector<2x8x1xf32> to vector<2x8x8xf32>
    %306 = arith.mulf %301, %305 : vector<2x8x8xf32>
    "tpu.trace_start"() <{level = 10 : i32, message = "bqk,bkd->bqd"}> : () -> ()
    %cst_101 = arith.constant dense<0.000000e+00> : vector<2x8x8xf32>
    %307 = tpu.matmul %306, %291, %cst_101 {dimension_numbers = #tpu.dot_dimension_numbers<[2], [1], [1], [2], [0, 0, 0, 1, 1, 2], [0], [0]>} : vector<2x8x8xf32>, vector<2x8x8xf32>, vector<2x8x8xf32> -> vector<2x8x8xf32>
    "tpu.trace_stop"() : () -> ()
    %308 = vector.shape_cast %307 : vector<2x8x8xf32> to vector<16x8xf32>
    %309 = tpu.concatenate %239, %262, %285, %308 in 1 : vector<16x8xf32>, vector<16x8xf32>, vector<16x8xf32>, vector<16x8xf32> -> vector<16x32xf32>
    %c1_102 = arith.constant 1 : index
    %c0_103 = arith.constant 0 : index
    %c0_104 = arith.constant 0 : index
    %310 = vector.load %arg6[%c1_102, %c0_103, %c0_104] : memref<2x32x32xf32, #tpu.memory_space<vmem>>, vector<1x32x32xf32>
    %311 = vector.shape_cast %310 : vector<1x32x32xf32> to vector<32x32xf32>
    %cst_105 = arith.constant dense<0.000000e+00> : vector<16x32xf32>
    %312 = tpu.matmul %309, %311, %cst_105 {dimension_numbers = #tpu.dot_dimension_numbers<[1], [0], [0], [1], [0, 0, 1, 1], [], []>} : vector<16x32xf32>, vector<32x32xf32>, vector<16x32xf32> -> vector<16x32xf32>
    %313 = vector.extract_strided_slice %209 {offsets = [0, 0], sizes = [1, 32], strides = [1, 1]} : vector<6x32xf32> to vector<1x32xf32>
    %314 = vector.broadcast %313 : vector<1x32xf32> to vector<16x32xf32>
    %315 = arith.addf %312, %314 : vector<16x32xf32>
    %316 = arith.addf %207, %315 : vector<16x32xf32>
    %317 = vector.extract_strided_slice %209 {offsets = [1, 0], sizes = [1, 32], strides = [1, 1]} : vector<6x32xf32> to vector<1x32xf32>
    %318 = vector.extract_strided_slice %209 {offsets = [2, 0], sizes = [1, 32], strides = [1, 1]} : vector<6x32xf32> to vector<1x32xf32>
    %cst_106 = arith.constant dense<0.000000e+00> : vector<16xf32>
    %319 = vector.multi_reduction <add>, %316, %cst_106 [1] : vector<16x32xf32> to vector<16xf32>
    %320 = vector.shape_cast %319 : vector<16xf32> to vector<16x1xf32>
    %cst_107 = arith.constant 3.200000e+01 : f32
    %321 = vector.broadcast %cst_107 : f32 to vector<16x1xf32>
    %322 = arith.divf %320, %321 : vector<16x1xf32>
    %323 = vector.broadcast %322 : vector<16x1xf32> to vector<16x32xf32>
    %324 = arith.subf %316, %323 : vector<16x32xf32>
    %325 = arith.mulf %324, %324 : vector<16x32xf32>
    %cst_108 = arith.constant dense<0.000000e+00> : vector<16xf32>
    %326 = vector.multi_reduction <add>, %325, %cst_108 [1] : vector<16x32xf32> to vector<16xf32>
    %327 = vector.shape_cast %326 : vector<16xf32> to vector<16x1xf32>
    %cst_109 = arith.constant 3.200000e+01 : f32
    %328 = vector.broadcast %cst_109 : f32 to vector<16x1xf32>
    %329 = arith.divf %327, %328 : vector<16x1xf32>
    %cst_110 = arith.constant 9.99999996E-13 : f32
    %330 = vector.broadcast %cst_110 : f32 to vector<16x1xf32>
    %331 = arith.addf %329, %330 : vector<16x1xf32>
    %332 = math.rsqrt %331 : vector<16x1xf32>
    %333 = vector.broadcast %332 : vector<16x1xf32> to vector<16x32xf32>
    %334 = arith.mulf %324, %333 : vector<16x32xf32>
    %335 = vector.broadcast %317 : vector<1x32xf32> to vector<16x32xf32>
    %336 = arith.mulf %334, %335 : vector<16x32xf32>
    %337 = vector.broadcast %318 : vector<1x32xf32> to vector<16x32xf32>
    %338 = arith.addf %336, %337 : vector<16x32xf32>
    %c1_111 = arith.constant 1 : index
    %c0_112 = arith.constant 0 : index
    %c0_113 = arith.constant 0 : index
    %339 = vector.load %arg7[%c1_111, %c0_112, %c0_113] : memref<2x32x64xf32, #tpu.memory_space<vmem>>, vector<1x32x64xf32>
    %340 = vector.shape_cast %339 : vector<1x32x64xf32> to vector<32x64xf32>
    %cst_114 = arith.constant dense<0.000000e+00> : vector<16x64xf32>
    %341 = tpu.matmul %338, %340, %cst_114 {dimension_numbers = #tpu.dot_dimension_numbers<[1], [0], [0], [1], [0, 0, 1, 1], [], []>} : vector<16x32xf32>, vector<32x64xf32>, vector<16x64xf32> -> vector<16x64xf32>
    %c1_115 = arith.constant 1 : index
    %c0_116 = arith.constant 0 : index
    %c0_117 = arith.constant 0 : index
    %342 = vector.load %arg8[%c1_115, %c0_116, %c0_117] : memref<2x1x64xf32, #tpu.memory_space<vmem>>, vector<1x1x64xf32>
    %343 = vector.shape_cast %342 : vector<1x1x64xf32> to vector<1x64xf32>
    %344 = vector.broadcast %343 : vector<1x64xf32> to vector<16x64xf32>
    %345 = arith.addf %341, %344 : vector<16x64xf32>
    %346 = arith.mulf %345, %345 : vector<16x64xf32>
    %347 = arith.mulf %345, %346 : vector<16x64xf32>
    %cst_118 = arith.constant 4.471500e-02 : f32
    %348 = vector.broadcast %cst_118 : f32 to vector<16x64xf32>
    %349 = arith.mulf %348, %347 : vector<16x64xf32>
    %350 = arith.addf %345, %349 : vector<16x64xf32>
    %cst_119 = arith.constant 0.797884583 : f32
    %351 = vector.broadcast %cst_119 : f32 to vector<16x64xf32>
    %352 = arith.mulf %351, %350 : vector<16x64xf32>
    %353 = math.tanh %352 : vector<16x64xf32>
    %cst_120 = arith.constant 1.000000e+00 : f32
    %354 = vector.broadcast %cst_120 : f32 to vector<16x64xf32>
    %355 = arith.addf %354, %353 : vector<16x64xf32>
    %cst_121 = arith.constant 5.000000e-01 : f32
    %356 = vector.broadcast %cst_121 : f32 to vector<16x64xf32>
    %357 = arith.mulf %356, %355 : vector<16x64xf32>
    %358 = arith.mulf %345, %357 : vector<16x64xf32>
    %c1_122 = arith.constant 1 : index
    %c0_123 = arith.constant 0 : index
    %c0_124 = arith.constant 0 : index
    %359 = vector.load %arg9[%c1_122, %c0_123, %c0_124] : memref<2x64x32xf32, #tpu.memory_space<vmem>>, vector<1x64x32xf32>
    %360 = vector.shape_cast %359 : vector<1x64x32xf32> to vector<64x32xf32>
    %cst_125 = arith.constant dense<0.000000e+00> : vector<16x32xf32>
    %361 = tpu.matmul %358, %360, %cst_125 {dimension_numbers = #tpu.dot_dimension_numbers<[1], [0], [0], [1], [0, 0, 1, 1], [], []>} : vector<16x64xf32>, vector<64x32xf32>, vector<16x32xf32> -> vector<16x32xf32>
    %362 = vector.extract_strided_slice %209 {offsets = [3, 0], sizes = [1, 32], strides = [1, 1]} : vector<6x32xf32> to vector<1x32xf32>
    %363 = vector.broadcast %362 : vector<1x32xf32> to vector<16x32xf32>
    %364 = arith.addf %361, %363 : vector<16x32xf32>
    %365 = arith.addf %338, %364 : vector<16x32xf32>
    %366 = vector.extract_strided_slice %209 {offsets = [4, 0], sizes = [1, 32], strides = [1, 1]} : vector<6x32xf32> to vector<1x32xf32>
    %367 = vector.extract_strided_slice %209 {offsets = [5, 0], sizes = [1, 32], strides = [1, 1]} : vector<6x32xf32> to vector<1x32xf32>
    %cst_126 = arith.constant dense<0.000000e+00> : vector<16xf32>
    %368 = vector.multi_reduction <add>, %365, %cst_126 [1] : vector<16x32xf32> to vector<16xf32>
    %369 = vector.shape_cast %368 : vector<16xf32> to vector<16x1xf32>
    %cst_127 = arith.constant 3.200000e+01 : f32
    %370 = vector.broadcast %cst_127 : f32 to vector<16x1xf32>
    %371 = arith.divf %369, %370 : vector<16x1xf32>
    %372 = vector.broadcast %371 : vector<16x1xf32> to vector<16x32xf32>
    %373 = arith.subf %365, %372 : vector<16x32xf32>
    %374 = arith.mulf %373, %373 : vector<16x32xf32>
    %cst_128 = arith.constant dense<0.000000e+00> : vector<16xf32>
    %375 = vector.multi_reduction <add>, %374, %cst_128 [1] : vector<16x32xf32> to vector<16xf32>
    %376 = vector.shape_cast %375 : vector<16xf32> to vector<16x1xf32>
    %cst_129 = arith.constant 3.200000e+01 : f32
    %377 = vector.broadcast %cst_129 : f32 to vector<16x1xf32>
    %378 = arith.divf %376, %377 : vector<16x1xf32>
    %cst_130 = arith.constant 9.99999996E-13 : f32
    %379 = vector.broadcast %cst_130 : f32 to vector<16x1xf32>
    %380 = arith.addf %378, %379 : vector<16x1xf32>
    %381 = math.rsqrt %380 : vector<16x1xf32>
    %382 = vector.broadcast %381 : vector<16x1xf32> to vector<16x32xf32>
    %383 = arith.mulf %373, %382 : vector<16x32xf32>
    %384 = vector.broadcast %366 : vector<1x32xf32> to vector<16x32xf32>
    %385 = arith.mulf %383, %384 : vector<16x32xf32>
    %386 = vector.broadcast %367 : vector<1x32xf32> to vector<16x32xf32>
    %387 = arith.addf %385, %386 : vector<16x32xf32>
    %388 = vector.extract_strided_slice %387 {offsets = [0, 0], sizes = [1, 32], strides = [1, 1]} : vector<16x32xf32> to vector<1x32xf32>
    %389 = vector.extract_strided_slice %387 {offsets = [8, 0], sizes = [1, 32], strides = [1, 1]} : vector<16x32xf32> to vector<1x32xf32>
    %390 = tpu.concatenate %388, %389 in 0 : vector<1x32xf32>, vector<1x32xf32> -> vector<2x32xf32>
    %c0_131 = arith.constant 0 : index
    %c0_132 = arith.constant 0 : index
    %391 = vector.load %arg11[%c0_131, %c0_132] : memref<2x32xf32, #tpu.memory_space<vmem>>, vector<2x32xf32>
    tpu.vector_store %arg11[%c0_131, %c0_132], %390 {strides = array<i32>} : memref<2x32xf32, #tpu.memory_space<vmem>>, vector<2x32xf32>,
    return
  }
  func.func @transform_0(%arg0: i32) -> (i32, i32) {
    %c0_i32 = arith.constant 0 : i32
    %c0_i32_0 = arith.constant 0 : i32
    %c0_i32_1 = arith.constant 0 : i32
    return %c0_i32, %c0_i32_0 : i32, i32
  }
  func.func @transform_1(%arg0: i32) -> (i32, i32, i32) {
    %c0_i32 = arith.constant 0 : i32
    %c0_i32_0 = arith.constant 0 : i32
    %c0_i32_1 = arith.constant 0 : i32
    %c0_i32_2 = arith.constant 0 : i32
    return %c0_i32, %c0_i32_0, %c0_i32_1 : i32, i32, i32
  }
  func.func @transform_2(%arg0: i32) -> (i32, i32) {
    %c0_i32 = arith.constant 0 : i32
    %c0_i32_0 = arith.constant 0 : i32
    %c0_i32_1 = arith.constant 0 : i32
    return %c0_i32, %c0_i32_0 : i32, i32
  }
  func.func @transform_3(%arg0: i32) -> (i32, i32, i32) {
    %c0_i32 = arith.constant 0 : i32
    %c0_i32_0 = arith.constant 0 : i32
    %c0_i32_1 = arith.constant 0 : i32
    %c0_i32_2 = arith.constant 0 : i32
    return %c0_i32, %c0_i32_0, %c0_i32_1 : i32, i32, i32
  }
  func.func @transform_4(%arg0: i32) -> (i32, i32, i32) {
    %c0_i32 = arith.constant 0 : i32
    %c0_i32_0 = arith.constant 0 : i32
    %c0_i32_1 = arith.constant 0 : i32
    %c0_i32_2 = arith.constant 0 : i32
    return %c0_i32, %c0_i32_0, %c0_i32_1 : i32, i32, i32
  }
  func.func @transform_5(%arg0: i32) -> (i32, i32, i32) {
    %c0_i32 = arith.constant 0 : i32
    %c0_i32_0 = arith.constant 0 : i32
    %c0_i32_1 = arith.constant 0 : i32
    %c0_i32_2 = arith.constant 0 : i32
    return %c0_i32, %c0_i32_0, %c0_i32_1 : i32, i32, i32
  }
  func.func @transform_6(%arg0: i32) -> (i32, i32, i32) {
    %c0_i32 = arith.constant 0 : i32
    %c0_i32_0 = arith.constant 0 : i32
    %c0_i32_1 = arith.constant 0 : i32
    %c0_i32_2 = arith.constant 0 : i32
    return %c0_i32, %c0_i32_0, %c0_i32_1 : i32, i32, i32
  }
  func.func @transform_7(%arg0: i32) -> (i32, i32, i32) {
    %c0_i32 = arith.constant 0 : i32
    %c0_i32_0 = arith.constant 0 : i32
    %c0_i32_1 = arith.constant 0 : i32
    %c0_i32_2 = arith.constant 0 : i32
    return %c0_i32, %c0_i32_0, %c0_i32_1 : i32, i32, i32
  }
  func.func @transform_8(%arg0: i32) -> (i32, i32, i32) {
    %c0_i32 = arith.constant 0 : i32
    %c0_i32_0 = arith.constant 0 : i32
    %c0_i32_1 = arith.constant 0 : i32
    %c0_i32_2 = arith.constant 0 : i32
    return %c0_i32, %c0_i32_0, %c0_i32_1 : i32, i32, i32
  }
  func.func @transform_9(%arg0: i32) -> (i32, i32, i32) {
    %c0_i32 = arith.constant 0 : i32
    %c0_i32_0 = arith.constant 0 : i32
    %c0_i32_1 = arith.constant 0 : i32
    %c0_i32_2 = arith.constant 0 : i32
    return %c0_i32, %c0_i32_0, %c0_i32_1 : i32, i32, i32
  }
  func.func @transform_10(%arg0: i32) -> (i32, i32) {
    %c0_i32 = arith.constant 0 : i32
    %c0_i32_0 = arith.constant 0 : i32
    %c0_i32_1 = arith.constant 0 : i32
    return %c0_i32, %c0_i32_0 : i32, i32
  }
}

</mosaic_0001>

<llo_original>
// kernel: tpu_custom_call.1
$region0: #{tpu_custom_call.1}
  #allocation0 [shape = 'u32[]', space=smem, size = 0x4, offset = 0x4, fixed_abs, tag = 'smem constant byte address 0x4 - core index']
  #allocation1 [shape = 'u32[72,128]{1,0:T(1,128)}', space=vmem, size = 0x9000, scoped, tag = 'internal scratch']
  %s0 = inlined_call_operand.vmem [shape: f32[16,32], index: 0, kind: input, shape index: {}]
  %s1 = inlined_call_operand.vmem [shape: f32[2,1,8], index: 1, kind: input, shape index: {}]
  %s2 = inlined_call_operand.vmem [shape: f32[2,32], index: 2, kind: input, shape index: {}]
  %s3 = inlined_call_operand.vmem [shape: f32[2,32,96], index: 3, kind: input, shape index: {}]
  %s4 = inlined_call_operand.vmem [shape: f32[2,1,96], index: 4, kind: input, shape index: {}]
  %s5 = inlined_call_operand.vmem [shape: f32[2,32,32], index: 5, kind: input, shape index: {}]
  %s6 = inlined_call_operand.vmem [shape: f32[2,32,64], index: 6, kind: input, shape index: {}]
  %s7 = inlined_call_operand.vmem [shape: f32[2,1,64], index: 7, kind: input, shape index: {}]
  %s8 = inlined_call_operand.vmem [shape: f32[2,64,32], index: 8, kind: input, shape index: {}]
  %s9 = inlined_call_operand.vmem [shape: f32[2,6,32], index: 9, kind: input, shape index: {}]
  %s10 = inlined_call_operand.hbm [shape: f32[2,32], index: 10, kind: output, shape index: {}]
  %s11 = sld [smem:[#allocation0]]
  $region50: #{tpu_custom_call.1} parent=0
    _
  %s13 = ssub.s32 1, %s11
  %s14 = scalar_select 0, %s13, %s11
  $region1: #{tpu_custom_call.1} parent=0
    #allocation2 [shape = 'u8[1024]{0}', space=vmem, size = 0x400, scoped, tag = 'output window, operand 0, single buffered']
    #allocation3 [shape = 's32[1]{0}', space=sflag, size = 0x4, scoped, tag = 'scoped memory for tpu_custom_call.1']
    %15 = vsyncpa [#allocation3], 0
    // Predicated region
    $region2: #{tpu_custom_call.1} parent=1 // pred_check
      _
    $region3: #{tpu_custom_call.1} parent=1 // pred_check_branch
      %17 = sbr.rel (0) target = $region5
    $region4: #{tpu_custom_call.1} parent=1 // pred_region
      _
    $region5: #{tpu_custom_call.1} parent=1 // pred_fallthru
      _
    // Predicated region
    $region6: #{tpu_custom_call.1} parent=1 // pred_check
      _
    $region7: #{tpu_custom_call.1} parent=1 // pred_check_branch
      %19 = sbr.rel (0) target = $region9
    $region8: #{tpu_custom_call.1} parent=1 // pred_region
      _
    $region9: #{tpu_custom_call.1} parent=1 // pred_fallthru
      _
    // Predicated region
    $region10: #{tpu_custom_call.1} parent=1 // pred_check
      _
    $region11: #{tpu_custom_call.1} parent=1 // pred_check_branch
      %21 = sbr.rel (0) target = $region13
    $region12: #{tpu_custom_call.1} parent=1 // pred_region
      _
    $region13: #{tpu_custom_call.1} parent=1 // pred_fallthru
      _
    // Predicated region
    $region14: #{tpu_custom_call.1} parent=1 // pred_check
      _
    $region15: #{tpu_custom_call.1} parent=1 // pred_check_branch
      %23 = sbr.rel (0) target = $region17
    $region16: #{tpu_custom_call.1} parent=1 // pred_region
      _
    $region17: #{tpu_custom_call.1} parent=1 // pred_fallthru
      _
    // Predicated region
    $region18: #{tpu_custom_call.1} parent=1 // pred_check
      _
    $region19: #{tpu_custom_call.1} parent=1 // pred_check_branch
      %25 = sbr.rel (0) target = $region21
    $region20: #{tpu_custom_call.1} parent=1 // pred_region
      _
    $region21: #{tpu_custom_call.1} parent=1 // pred_fallthru
      _
    // Predicated region
    $region22: #{tpu_custom_call.1} parent=1 // pred_check
      _
    $region23: #{tpu_custom_call.1} parent=1 // pred_check_branch
      %27 = sbr.rel (0) target = $region25
    $region24: #{tpu_custom_call.1} parent=1 // pred_region
      _
    $region25: #{tpu_custom_call.1} parent=1 // pred_fallthru
      _
    // Predicated region
    $region26: #{tpu_custom_call.1} parent=1 // pred_check
      _
    $region27: #{tpu_custom_call.1} parent=1 // pred_check_branch
      %29 = sbr.rel (0) target = $region29
    $region28: #{tpu_custom_call.1} parent=1 // pred_region
      _
    $region29: #{tpu_custom_call.1} parent=1 // pred_fallthru
      _
    // Predicated region
    $region30: #{tpu_custom_call.1} parent=1 // pred_check
      _
    $region31: #{tpu_custom_call.1} parent=1 // pred_check_branch
      %31 = sbr.rel (0) target = $region33
    $region32: #{tpu_custom_call.1} parent=1 // pred_region
      _
    $region33: #{tpu_custom_call.1} parent=1 // pred_fallthru
      _
    // Predicated region
    $region34: #{tpu_custom_call.1} parent=1 // pred_check
      _
    $region35: #{tpu_custom_call.1} parent=1 // pred_check_branch
      %33 = sbr.rel (0) target = $region37
    $region36: #{tpu_custom_call.1} parent=1 // pred_region
      _
    $region37: #{tpu_custom_call.1} parent=1 // pred_fallthru
      _
    // Predicated region
    $region38: #{tpu_custom_call.1} parent=1 // pred_check
      _
    $region39: #{tpu_custom_call.1} parent=1 // pred_check_branch
      %35 = sbr.rel (0) target = $region41
    $region40: #{tpu_custom_call.1} parent=1 // pred_region
      _
    $region41: #{tpu_custom_call.1} parent=1 // pred_fallthru
      _
    %v36 = vld [vmem:[%s0] sm:$0xff]
    %v37 = vld [vmem:[%s0 + $0x8] sm:$0xff]
    %v38 = vld [vmem:[%s1] sm:$0x1]
    %v39 = vld [vmem:[%s1 + $0x1] sm:$0x1]
    %v40 = vsub.f32 1.0, %v38
    %v41 = vsub.f32 1.0, %v39
    %v42 = vmul.f32 %v40, -1e+09
    %v43 = vmul.f32 %v41, -1e+09
    %v44 = vld [vmem:[%s2] sm:$0x1]
    %v45 = vld [vmem:[%s2 + $0x1] sm:$0x1]
    %vm46 = vcmask 261120
    %v47 = vsel %vm46, %v36, 0.0
    %48 = vadd.xlane.f32.xlu0 %v47
    %v49 = vpop.xlane.xlu0 %48
    %v50 = vsel %vm46, %v37, 0.0
    %51 = vadd.xlane.f32.xlu0 %v50
    %v52 = vpop.xlane.xlu0 %51
    %v53 = vrcp.pop 32.0
    %v54 = vmul.f32 32.0, %v53
    %v55 = vsub.f32 1.0, %v54
    %v56 = vmul.f32 %v53, %v55
    %v57 = vadd.f32 %v53, %v56
    %vm58 = vweird.f32 %v53
    %v59 = vsel %vm58, %v53, %v57
    %v60 = vmul.f32 %v49, %v59
    %v61 = vmul.f32 %v52, %v59
    %v62 = vsub.f32 %v36, %v60
    %v63 = vsub.f32 %v37, %v61
    %v64 = vmul.f32 %v62, %v62
    %v65 = vmul.f32 %v63, %v63
    %v66 = vsel %vm46, %v64, 0.0
    %67 = vadd.xlane.f32.xlu0 %v66
    %v68 = vpop.xlane.xlu0 %67
    %v69 = vsel %vm46, %v65, 0.0
    %70 = vadd.xlane.f32.xlu0 %v69
    %v71 = vpop.xlane.xlu0 %70
    %v72 = vmul.f32 %v68, %v59
    %v73 = vmul.f32 %v71, %v59
    %v74 = vadd.f32 %v72, 1e-12
    %v75 = vadd.f32 %v73, 1e-12
    %v76 = vrsqrt.pop %v74
    %v77 = vmul.f32 %v76, %v74
    %v78 = vmul.f32 %v77, %v76
    %v79 = vmul.f32 0.5, %v78
    %v80 = vsub.f32 1.5, %v79
    %v81 = vmul.f32 %v76, %v80
    %vm82 = vweird.f32 %v74
    %vm83 = vweird.f32 %v76
    %vm84 = vmor %vm82, %vm83
    %v85 = vsel %vm84, %v76, %v81
    %v86 = vrsqrt.pop %v75
    %v87 = vmul.f32 %v86, %v75
    %v88 = vmul.f32 %v87, %v86
    %v89 = vmul.f32 0.5, %v88
    %v90 = vsub.f32 1.5, %v89
    %v91 = vmul.f32 %v86, %v90
    %vm92 = vweird.f32 %v75
    %vm93 = vweird.f32 %v86
    %vm94 = vmor %vm92, %vm93
    %v95 = vsel %vm94, %v86, %v91
    %v96 = vmul.f32 %v62, %v85
    %v97 = vmul.f32 %v63, %v95
    %v98 = vperm.slane %v44, 0
    %v99 = vmul.f32 %v96, %v98
    %v100 = vmul.f32 %v97, %v98
    %v101 = vperm.slane %v45, 0
    %v102 = vadd.f32 %v99, %v101
    %v103 = vadd.f32 %v100, %v101
    %v104 = vld [vmem:[%s9] sm:$0x3f]
    %v105 = vld [vmem:[%s3] sm:$0xff]
    %v106 = vld [vmem:[%s3 + $0x8] sm:$0xff]
    %v107 = vld [vmem:[%s3 + $0x10] sm:$0xff]
    %v108 = vld [vmem:[%s3 + $0x18] sm:$0xff]
    %v109 = vld [vmem:[%s4] sm:$0x1]
    %v111 = vperm.slane %v109, 0
    %v114 = vsel %vm46, %v102, 0
    %v117 = vsel %vm46, %v103, 0
    %119 = vmatpush.msra.mxu0 0.0
    %120 = vmatpush.msra.mxu0 0.0
    %121 = vmatpush.msra.mxu0 0.0
    %122 = vmatpush.msra.mxu0 0.0
    %123 = vmatpush.msra.mxu0 0.0
    %124 = vmatpush.msra.mxu0 0.0
    %125 = vmatpush.msra.mxu0 0.0
    %126 = vmatpush.msra.mxu0 0.0
    %127 = vmatpush.msra.mxu0 0.0
    %128 = vmatpush.msra.mxu0 0.0
    %129 = vmatpush.msra.mxu0 0.0
    %130 = vmatpush.msra.mxu0 0.0
    %131 = vmatpush.msra.mxu0 %v108
    %132 = vmatpush.msra.mxu0 %v107
    %133 = vmatpush.msra.mxu0 %v106
    %134 = vmatpush.msra.mxu0 %v105
    %135 = vmatmul.f32.gmra.mxu0 %v114
    %v136 = vpop.f32.mrf.mxu0
    %v137 = vadd.f32 %v111, %v136
    %138 = vmatmul.f32.gmra.mxu0 %v117
    %v139 = vpop.f32.mrf.mxu0
    %v140 = vadd.f32 %v111, %v139
    %141 = vdwg.mxu0
    %143 = vrot.lane.b32.xlu0 %v137, 96
    %v144 = vpop.permute.xlu0 %143
    %vm145 = vcmask 64512
    %v146 = vsel %vm145, %v137, 0
    %v148 = vsel %vm145, %v144, 0
    %150 = vmatpush.xpose.msra.mxu0 0.0
    %151 = vmatpush.xpose.msra.mxu0 0.0
    %152 = vmatpush.xpose.msra.mxu0 0.0
    %153 = vmatpush.xpose.msra.mxu0 0.0
    %154 = vmatpush.xpose.msra.mxu0 0.0
    %155 = vmatpush.xpose.msra.mxu0 0.0
    %156 = vmatpush.xpose.msra.mxu0 0.0
    %157 = vmatpush.xpose.msra.mxu0 0.0
    %158 = vmatpush.xpose.msra.mxu0 0.0
    %159 = vmatpush.xpose.msra.mxu0 0.0
    %160 = vmatpush.xpose.msra.mxu0 0.0
    %161 = vmatpush.xpose.msra.mxu0 0.0
    %162 = vmatpush.xpose.msra.mxu0 0.0
    %163 = vmatpush.xpose.msra.mxu0 0.0
    %164 = vmatpush.xpose.msra.mxu0 0.0
    %165 = vmatpush.xpose.msra.mxu0 %v148
    %166 = vmatmul.f32.gmra.mxu0 %v146
    %v167 = vpop.f32.mrf.mxu0
    %v168 = vadd.f32 0.0, %v167
    %169 = vdwg.mxu0
    %171 = vrot.lane.b32.xlu0 %v140, 96
    %v172 = vpop.permute.xlu0 %171
    %v173 = vsel %vm145, %v140, 0
    %v175 = vsel %vm145, %v172, 0
    %177 = vmatpush.xpose.msra.mxu0 0.0
    %178 = vmatpush.xpose.msra.mxu0 0.0
    %179 = vmatpush.xpose.msra.mxu0 0.0
    %180 = vmatpush.xpose.msra.mxu0 0.0
    %181 = vmatpush.xpose.msra.mxu0 0.0
    %182 = vmatpush.xpose.msra.mxu0 0.0
    %183 = vmatpush.xpose.msra.mxu0 0.0
    %184 = vmatpush.xpose.msra.mxu0 0.0
    %185 = vmatpush.xpose.msra.mxu0 0.0
    %186 = vmatpush.xpose.msra.mxu0 0.0
    %187 = vmatpush.xpose.msra.mxu0 0.0
    %188 = vmatpush.xpose.msra.mxu0 0.0
    %189 = vmatpush.xpose.msra.mxu0 0.0
    %190 = vmatpush.xpose.msra.mxu0 0.0
    %191 = vmatpush.xpose.msra.mxu0 0.0
    %192 = vmatpush.xpose.msra.mxu0 %v175
    %193 = vmatmul.f32.gmra.mxu0 %v173
    %v194 = vpop.f32.mrf.mxu0
    %v195 = vadd.f32 0.0, %v194
    %196 = vdwg.mxu0
    %v197 = vmul.f32 %v168, 0.35355338
    %v198 = vmul.f32 %v195, 0.35355338
    %v201 = vperm.slane %v42, 0
    %v202 = vperm.slane %v43, 0
    %v205 = vadd.f32 %v197, %v201
    %v206 = vadd.f32 %v198, %v202
    %v207 = vsel %vm145, %v205, -inf
    %208 = vmax.xlane.f32.xlu0 %v207
    %v209 = vpop.xlane.xlu0 %208
    %v210 = vsel %vm145, %v206, -inf
    %211 = vmax.xlane.f32.xlu0 %v210
    %v212 = vpop.xlane.xlu0 %211
    %v213 = vsub.f32 %v205, %v209
    %v214 = vsub.f32 %v206, %v212
    %v215 = vmul.f32 %v213, 1.442695
    %v216 = vpow.pop %v215
    %v217 = vmul.f32 %v214, 1.442695
    %v218 = vpow.pop %v217
    %v219 = vsel %vm145, %v216, 0.0
    %220 = vadd.xlane.f32.xlu0 %v219
    %v221 = vpop.xlane.xlu0 %220
    %v222 = vsel %vm145, %v218, 0.0
    %223 = vadd.xlane.f32.xlu0 %v222
    %v224 = vpop.xlane.xlu0 %223
    %v225 = vrcp.pop %v221
    %v226 = vrcp.pop %v224
    %v227 = vmul.f32 %v216, %v225
    %v228 = vmul.f32 %v218, %v226
    %229 = vrot.lane.b32.xlu0 %v137, 64
    %v230 = vpop.permute.xlu0 %229
    %v233 = vsel %vm145, %v227, 0
    %235 = vmatpush.msra.mxu0 0.0
    %236 = vmatpush.msra.mxu0 0.0
    %237 = vmatpush.msra.mxu0 0.0
    %238 = vmatpush.msra.mxu0 0.0
    %239 = vmatpush.msra.mxu0 0.0
    %240 = vmatpush.msra.mxu0 0.0
    %241 = vmatpush.msra.mxu0 0.0
    %242 = vmatpush.msra.mxu0 0.0
    %243 = vmatpush.msra.mxu0 0.0
    %244 = vmatpush.msra.mxu0 0.0
    %245 = vmatpush.msra.mxu0 0.0
    %246 = vmatpush.msra.mxu0 0.0
    %247 = vmatpush.msra.mxu0 0.0
    %248 = vmatpush.msra.mxu0 0.0
    %249 = vmatpush.msra.mxu0 0.0
    %250 = vmatpush.msra.mxu0 %v230
    %251 = vmatmul.f32.gmra.mxu0 %v233
    %v252 = vpop.f32.mrf.mxu0
    %v253 = vadd.f32 0.0, %v252
    %254 = vdwg.mxu0
    %255 = vrot.lane.b32.xlu0 %v140, 64
    %v256 = vpop.permute.xlu0 %255
    %v259 = vsel %vm145, %v228, 0
    %261 = vmatpush.msra.mxu0 0.0
    %262 = vmatpush.msra.mxu0 0.0
    %263 = vmatpush.msra.mxu0 0.0
    %264 = vmatpush.msra.mxu0 0.0
    %265 = vmatpush.msra.mxu0 0.0
    %266 = vmatpush.msra.mxu0 0.0
    %267 = vmatpush.msra.mxu0 0.0
    %268 = vmatpush.msra.mxu0 0.0
    %269 = vmatpush.msra.mxu0 0.0
    %270 = vmatpush.msra.mxu0 0.0
    %271 = vmatpush.msra.mxu0 0.0
    %272 = vmatpush.msra.mxu0 0.0
    %273 = vmatpush.msra.mxu0 0.0
    %274 = vmatpush.msra.mxu0 0.0
    %275 = vmatpush.msra.mxu0 0.0
    %276 = vmatpush.msra.mxu0 %v256
    %277 = vmatmul.f32.gmra.mxu0 %v259
    %v278 = vpop.f32.mrf.mxu0
    %v279 = vadd.f32 0.0, %v278
    %280 = vdwg.mxu0
    %281 = vrot.lane.b32.xlu0 %v137, 120
    %v282 = vpop.permute.xlu0 %281
    %283 = vrot.lane.b32.xlu0 %v137, 88
    %v284 = vpop.permute.xlu0 %283
    %v285 = vsel %vm145, %v282, 0
    %v287 = vsel %vm145, %v284, 0
    %289 = vmatpush.xpose.msra.mxu0 0.0
    %290 = vmatpush.xpose.msra.mxu0 0.0
    %291 = vmatpush.xpose.msra.mxu0 0.0
    %292 = vmatpush.xpose.msra.mxu0 0.0
    %293 = vmatpush.xpose.msra.mxu0 0.0
    %294 = vmatpush.xpose.msra.mxu0 0.0
    %295 = vmatpush.xpose.msra.mxu0 0.0
    %296 = vmatpush.xpose.msra.mxu0 0.0
    %297 = vmatpush.xpose.msra.mxu0 0.0
    %298 = vmatpush.xpose.msra.mxu0 0.0
    %299 = vmatpush.xpose.msra.mxu0 0.0
    %300 = vmatpush.xpose.msra.mxu0 0.0
    %301 = vmatpush.xpose.msra.mxu0 0.0
    %302 = vmatpush.xpose.msra.mxu0 0.0
    %303 = vmatpush.xpose.msra.mxu0 0.0
    %304 = vmatpush.xpose.msra.mxu0 %v287
    %305 = vmatmul.f32.gmra.mxu0 %v285
    %v306 = vpop.f32.mrf.mxu0
    %v307 = vadd.f32 0.0, %v306
    %308 = vdwg.mxu0
    %309 = vrot.lane.b32.xlu0 %v140, 120
    %v310 = vpop.permute.xlu0 %309
    %311 = vrot.lane.b32.xlu0 %v140, 88
    %v312 = vpop.permute.xlu0 %311
    %v313 = vsel %vm145, %v310, 0
    %v315 = vsel %vm145, %v312, 0
    %317 = vmatpush.xpose.msra.mxu0 0.0
    %318 = vmatpush.xpose.msra.mxu0 0.0
    %319 = vmatpush.xpose.msra.mxu0 0.0
    %320 = vmatpush.xpose.msra.mxu0 0.0
    %321 = vmatpush.xpose.msra.mxu0 0.0
    %322 = vmatpush.xpose.msra.mxu0 0.0
    %323 = vmatpush.xpose.msra.mxu0 0.0
    %324 = vmatpush.xpose.msra.mxu0 0.0
    %325 = vmatpush.xpose.msra.mxu0 0.0
    %326 = vmatpush.xpose.msra.mxu0 0.0
    %327 = vmatpush.xpose.msra.mxu0 0.0
    %328 = vmatpush.xpose.msra.mxu0 0.0
    %329 = vmatpush.xpose.msra.mxu0 0.0
    %330 = vmatpush.xpose.msra.mxu0 0.0
    %331 = vmatpush.xpose.msra.mxu0 0.0
    %332 = vmatpush.xpose.msra.mxu0 %v315
    %333 = vmatmul.f32.gmra.mxu0 %v313
    %v334 = vpop.f32.mrf.mxu0
    %v335 = vadd.f32 0.0, %v334
    %336 = vdwg.mxu0
    %v337 = vmul.f32 %v307, 0.35355338
    %v338 = vmul.f32 %v335, 0.35355338
    %v339 = vadd.f32 %v337, %v201
    %v340 = vadd.f32 %v338, %v202
    %v341 = vsel %vm145, %v339, -inf
    %342 = vmax.xlane.f32.xlu0 %v341
    %v343 = vpop.xlane.xlu0 %342
    %v344 = vsel %vm145, %v340, -inf
    %345 = vmax.xlane.f32.xlu0 %v344
    %v346 = vpop.xlane.xlu0 %345
    %v347 = vsub.f32 %v339, %v343
    %v348 = vsub.f32 %v340, %v346
    %v349 = vmul.f32 %v347, 1.442695
    %v350 = vpow.pop %v349
    %v351 = vmul.f32 %v348, 1.442695
    %v352 = vpow.pop %v351
    %v353 = vsel %vm145, %v350, 0.0
    %354 = vadd.xlane.f32.xlu0 %v353
    %v355 = vpop.xlane.xlu0 %354
    %v356 = vsel %vm145, %v352, 0.0
    %357 = vadd.xlane.f32.xlu0 %v356
    %v358 = vpop.xlane.xlu0 %357
    %v359 = vrcp.pop %v355
    %v360 = vrcp.pop %v358
    %v361 = vmul.f32 %v350, %v359
    %v362 = vmul.f32 %v352, %v360
    %363 = vrot.lane.b32.xlu0 %v137, 56
    %v364 = vpop.permute.xlu0 %363
    %v367 = vsel %vm145, %v361, 0
    %369 = vmatpush.msra.mxu0 0.0
    %370 = vmatpush.msra.mxu0 0.0
    %371 = vmatpush.msra.mxu0 0.0
    %372 = vmatpush.msra.mxu0 0.0
    %373 = vmatpush.msra.mxu0 0.0
    %374 = vmatpush.msra.mxu0 0.0
    %375 = vmatpush.msra.mxu0 0.0
    %376 = vmatpush.msra.mxu0 0.0
    %377 = vmatpush.msra.mxu0 0.0
    %378 = vmatpush.msra.mxu0 0.0
    %379 = vmatpush.msra.mxu0 0.0
    %380 = vmatpush.msra.mxu0 0.0
    %381 = vmatpush.msra.mxu0 0.0
    %382 = vmatpush.msra.mxu0 0.0
    %383 = vmatpush.msra.mxu0 0.0
    %384 = vmatpush.msra.mxu0 %v364
    %385 = vmatmul.f32.gmra.mxu0 %v367
    %v386 = vpop.f32.mrf.mxu0
    %v387 = vadd.f32 0.0, %v386
    %388 = vdwg.mxu0
    %389 = vrot.lane.b32.xlu0 %v140, 56
    %v390 = vpop.permute.xlu0 %389
    %v393 = vsel %vm145, %v362, 0
    %395 = vmatpush.msra.mxu0 0.0
    %396 = vmatpush.msra.mxu0 0.0
    %397 = vmatpush.msra.mxu0 0.0
    %398 = vmatpush.msra.mxu0 0.0
    %399 = vmatpush.msra.mxu0 0.0
    %400 = vmatpush.msra.mxu0 0.0
    %401 = vmatpush.msra.mxu0 0.0
    %402 = vmatpush.msra.mxu0 0.0
    %403 = vmatpush.msra.mxu0 0.0
    %404 = vmatpush.msra.mxu0 0.0
    %405 = vmatpush.msra.mxu0 0.0
    %406 = vmatpush.msra.mxu0 0.0
    %407 = vmatpush.msra.mxu0 0.0
    %408 = vmatpush.msra.mxu0 0.0
    %409 = vmatpush.msra.mxu0 0.0
    %410 = vmatpush.msra.mxu0 %v390
    %411 = vmatmul.f32.gmra.mxu0 %v393
    %v412 = vpop.f32.mrf.mxu0
    %v413 = vadd.f32 0.0, %v412
    %414 = vdwg.mxu0
    %415 = vrot.lane.b32.xlu0 %v137, 112
    %v416 = vpop.permute.xlu0 %415
    %417 = vrot.lane.b32.xlu0 %v137, 80
    %v418 = vpop.permute.xlu0 %417
    %v419 = vsel %vm145, %v416, 0
    %v421 = vsel %vm145, %v418, 0
    %423 = vmatpush.xpose.msra.mxu0 0.0
    %424 = vmatpush.xpose.msra.mxu0 0.0
    %425 = vmatpush.xpose.msra.mxu0 0.0
    %426 = vmatpush.xpose.msra.mxu0 0.0
    %427 = vmatpush.xpose.msra.mxu0 0.0
    %428 = vmatpush.xpose.msra.mxu0 0.0
    %429 = vmatpush.xpose.msra.mxu0 0.0
    %430 = vmatpush.xpose.msra.mxu0 0.0
    %431 = vmatpush.xpose.msra.mxu0 0.0
    %432 = vmatpush.xpose.msra.mxu0 0.0
    %433 = vmatpush.xpose.msra.mxu0 0.0
    %434 = vmatpush.xpose.msra.mxu0 0.0
    %435 = vmatpush.xpose.msra.mxu0 0.0
    %436 = vmatpush.xpose.msra.mxu0 0.0
    %437 = vmatpush.xpose.msra.mxu0 0.0
    %438 = vmatpush.xpose.msra.mxu0 %v421
    %439 = vmatmul.f32.gmra.mxu0 %v419
    %v440 = vpop.f32.mrf.mxu0
    %v441 = vadd.f32 0.0, %v440
    %442 = vdwg.mxu0
    %443 = vrot.lane.b32.xlu0 %v140, 112
    %v444 = vpop.permute.xlu0 %443
    %445 = vrot.lane.b32.xlu0 %v140, 80
    %v446 = vpop.permute.xlu0 %445
    %v447 = vsel %vm145, %v444, 0
    %v449 = vsel %vm145, %v446, 0
    %451 = vmatpush.xpose.msra.mxu0 0.0
    %452 = vmatpush.xpose.msra.mxu0 0.0
    %453 = vmatpush.xpose.msra.mxu0 0.0
    %454 = vmatpush.xpose.msra.mxu0 0.0
    %455 = vmatpush.xpose.msra.mxu0 0.0
    %456 = vmatpush.xpose.msra.mxu0 0.0
    %457 = vmatpush.xpose.msra.mxu0 0.0
    %458 = vmatpush.xpose.msra.mxu0 0.0
    %459 = vmatpush.xpose.msra.mxu0 0.0
    %460 = vmatpush.xpose.msra.mxu0 0.0
    %461 = vmatpush.xpose.msra.mxu0 0.0
    %462 = vmatpush.xpose.msra.mxu0 0.0
    %463 = vmatpush.xpose.msra.mxu0 0.0
    %464 = vmatpush.xpose.msra.mxu0 0.0
    %465 = vmatpush.xpose.msra.mxu0 0.0
    %466 = vmatpush.xpose.msra.mxu0 %v449
    %467 = vmatmul.f32.gmra.mxu0 %v447
    %v468 = vpop.f32.mrf.mxu0
    %v469 = vadd.f32 0.0, %v468
    %470 = vdwg.mxu0
    %v471 = vmul.f32 %v441, 0.35355338
    %v472 = vmul.f32 %v469, 0.35355338
    %v473 = vadd.f32 %v471, %v201
    %v474 = vadd.f32 %v472, %v202
    %v475 = vsel %vm145, %v473, -inf
    %476 = vmax.xlane.f32.xlu0 %v475
    %v477 = vpop.xlane.xlu0 %476
    %v478 = vsel %vm145, %v474, -inf
    %479 = vmax.xlane.f32.xlu0 %v478
    %v480 = vpop.xlane.xlu0 %479
    %v481 = vsub.f32 %v473, %v477
    %v482 = vsub.f32 %v474, %v480
    %v483 = vmul.f32 %v481, 1.442695
    %v484 = vpow.pop %v483
    %v485 = vmul.f32 %v482, 1.442695
    %v486 = vpow.pop %v485
    %v487 = vsel %vm145, %v484, 0.0
    %488 = vadd.xlane.f32.xlu0 %v487
    %v489 = vpop.xlane.xlu0 %488
    %v490 = vsel %vm145, %v486, 0.0
    %491 = vadd.xlane.f32.xlu0 %v490
    %v492 = vpop.xlane.xlu0 %491
    %v493 = vrcp.pop %v489
    %v494 = vrcp.pop %v492
    %v495 = vmul.f32 %v484, %v493
    %v496 = vmul.f32 %v486, %v494
    %497 = vrot.lane.b32.xlu0 %v137, 48
    %v498 = vpop.permute.xlu0 %497
    %v501 = vsel %vm145, %v495, 0
    %503 = vmatpush.msra.mxu0 0.0
    %504 = vmatpush.msra.mxu0 0.0
    %505 = vmatpush.msra.mxu0 0.0
    %506 = vmatpush.msra.mxu0 0.0
    %507 = vmatpush.msra.mxu0 0.0
    %508 = vmatpush.msra.mxu0 0.0
    %509 = vmatpush.msra.mxu0 0.0
    %510 = vmatpush.msra.mxu0 0.0
    %511 = vmatpush.msra.mxu0 0.0
    %512 = vmatpush.msra.mxu0 0.0
    %513 = vmatpush.msra.mxu0 0.0
    %514 = vmatpush.msra.mxu0 0.0
    %515 = vmatpush.msra.mxu0 0.0
    %516 = vmatpush.msra.mxu0 0.0
    %517 = vmatpush.msra.mxu0 0.0
    %518 = vmatpush.msra.mxu0 %v498
    %519 = vmatmul.f32.gmra.mxu0 %v501
    %v520 = vpop.f32.mrf.mxu0
    %v521 = vadd.f32 0.0, %v520
    %522 = vdwg.mxu0
    %523 = vrot.lane.b32.xlu0 %v140, 48
    %v524 = vpop.permute.xlu0 %523
    %v527 = vsel %vm145, %v496, 0
    %529 = vmatpush.msra.mxu0 0.0
    %530 = vmatpush.msra.mxu0 0.0
    %531 = vmatpush.msra.mxu0 0.0
    %532 = vmatpush.msra.mxu0 0.0
    %533 = vmatpush.msra.mxu0 0.0
    %534 = vmatpush.msra.mxu0 0.0
    %535 = vmatpush.msra.mxu0 0.0
    %536 = vmatpush.msra.mxu0 0.0
    %537 = vmatpush.msra.mxu0 0.0
    %538 = vmatpush.msra.mxu0 0.0
    %539 = vmatpush.msra.mxu0 0.0
    %540 = vmatpush.msra.mxu0 0.0
    %541 = vmatpush.msra.mxu0 0.0
    %542 = vmatpush.msra.mxu0 0.0
    %543 = vmatpush.msra.mxu0 0.0
    %544 = vmatpush.msra.mxu0 %v524
    %545 = vmatmul.f32.gmra.mxu0 %v527
    %v546 = vpop.f32.mrf.mxu0
    %v547 = vadd.f32 0.0, %v546
    %548 = vdwg.mxu0
    %549 = vrot.lane.b32.xlu0 %v137, 104
    %v550 = vpop.permute.xlu0 %549
    %551 = vrot.lane.b32.xlu0 %v137, 72
    %v552 = vpop.permute.xlu0 %551
    %v553 = vsel %vm145, %v550, 0
    %v555 = vsel %vm145, %v552, 0
    %557 = vmatpush.xpose.msra.mxu0 0.0
    %558 = vmatpush.xpose.msra.mxu0 0.0
    %559 = vmatpush.xpose.msra.mxu0 0.0
    %560 = vmatpush.xpose.msra.mxu0 0.0
    %561 = vmatpush.xpose.msra.mxu0 0.0
    %562 = vmatpush.xpose.msra.mxu0 0.0
    %563 = vmatpush.xpose.msra.mxu0 0.0
    %564 = vmatpush.xpose.msra.mxu0 0.0
    %565 = vmatpush.xpose.msra.mxu0 0.0
    %566 = vmatpush.xpose.msra.mxu0 0.0
    %567 = vmatpush.xpose.msra.mxu0 0.0
    %568 = vmatpush.xpose.msra.mxu0 0.0
    %569 = vmatpush.xpose.msra.mxu0 0.0
    %570 = vmatpush.xpose.msra.mxu0 0.0
    %571 = vmatpush.xpose.msra.mxu0 0.0
    %572 = vmatpush.xpose.msra.mxu0 %v555
    %573 = vmatmul.f32.gmra.mxu0 %v553
    %v574 = vpop.f32.mrf.mxu0
    %v575 = vadd.f32 0.0, %v574
    %576 = vdwg.mxu0
    %577 = vrot.lane.b32.xlu0 %v140, 104
    %v578 = vpop.permute.xlu0 %577
    %579 = vrot.lane.b32.xlu0 %v140, 72
    %v580 = vpop.permute.xlu0 %579
    %v581 = vsel %vm145, %v578, 0
    %v583 = vsel %vm145, %v580, 0
    %585 = vmatpush.xpose.msra.mxu0 0.0
    %586 = vmatpush.xpose.msra.mxu0 0.0
    %587 = vmatpush.xpose.msra.mxu0 0.0
    %588 = vmatpush.xpose.msra.mxu0 0.0
    %589 = vmatpush.xpose.msra.mxu0 0.0
    %590 = vmatpush.xpose.msra.mxu0 0.0
    %591 = vmatpush.xpose.msra.mxu0 0.0
    %592 = vmatpush.xpose.msra.mxu0 0.0
    %593 = vmatpush.xpose.msra.mxu0 0.0
    %594 = vmatpush.xpose.msra.mxu0 0.0
    %595 = vmatpush.xpose.msra.mxu0 0.0
    %596 = vmatpush.xpose.msra.mxu0 0.0
    %597 = vmatpush.xpose.msra.mxu0 0.0
    %598 = vmatpush.xpose.msra.mxu0 0.0
    %599 = vmatpush.xpose.msra.mxu0 0.0
    %600 = vmatpush.xpose.msra.mxu0 %v583
    %601 = vmatmul.f32.gmra.mxu0 %v581
    %v602 = vpop.f32.mrf.mxu0
    %v603 = vadd.f32 0.0, %v602
    %604 = vdwg.mxu0
    %v605 = vmul.f32 %v575, 0.35355338
    %v606 = vmul.f32 %v603, 0.35355338
    %v607 = vadd.f32 %v605, %v201
    %v608 = vadd.f32 %v606, %v202
    %v609 = vsel %vm145, %v607, -inf
    %610 = vmax.xlane.f32.xlu0 %v609
    %v611 = vpop.xlane.xlu0 %610
    %v612 = vsel %vm145, %v608, -inf
    %613 = vmax.xlane.f32.xlu0 %v612
    %v614 = vpop.xlane.xlu0 %613
    %v615 = vsub.f32 %v607, %v611
    %v616 = vsub.f32 %v608, %v614
    %v617 = vmul.f32 %v615, 1.442695
    %v618 = vpow.pop %v617
    %v619 = vmul.f32 %v616, 1.442695
    %v620 = vpow.pop %v619
    %v621 = vsel %vm145, %v618, 0.0
    %622 = vadd.xlane.f32.xlu0 %v621
    %v623 = vpop.xlane.xlu0 %622
    %v624 = vsel %vm145, %v620, 0.0
    %625 = vadd.xlane.f32.xlu0 %v624
    %v626 = vpop.xlane.xlu0 %625
    %v627 = vrcp.pop %v623
    %v628 = vrcp.pop %v626
    %v629 = vmul.f32 %v618, %v627
    %v630 = vmul.f32 %v620, %v628
    %631 = vrot.lane.b32.xlu0 %v137, 40
    %v632 = vpop.permute.xlu0 %631
    %v635 = vsel %vm145, %v629, 0
    %637 = vmatpush.msra.mxu0 0.0
    %638 = vmatpush.msra.mxu0 0.0
    %639 = vmatpush.msra.mxu0 0.0
    %640 = vmatpush.msra.mxu0 0.0
    %641 = vmatpush.msra.mxu0 0.0
    %642 = vmatpush.msra.mxu0 0.0
    %643 = vmatpush.msra.mxu0 0.0
    %644 = vmatpush.msra.mxu0 0.0
    %645 = vmatpush.msra.mxu0 0.0
    %646 = vmatpush.msra.mxu0 0.0
    %647 = vmatpush.msra.mxu0 0.0
    %648 = vmatpush.msra.mxu0 0.0
    %649 = vmatpush.msra.mxu0 0.0
    %650 = vmatpush.msra.mxu0 0.0
    %651 = vmatpush.msra.mxu0 0.0
    %652 = vmatpush.msra.mxu0 %v632
    %653 = vmatmul.f32.gmra.mxu0 %v635
    %v654 = vpop.f32.mrf.mxu0
    %v655 = vadd.f32 0.0, %v654
    %656 = vdwg.mxu0
    %657 = vrot.lane.b32.xlu0 %v140, 40
    %v658 = vpop.permute.xlu0 %657
    %v661 = vsel %vm145, %v630, 0
    %663 = vmatpush.msra.mxu0 0.0
    %664 = vmatpush.msra.mxu0 0.0
    %665 = vmatpush.msra.mxu0 0.0
    %666 = vmatpush.msra.mxu0 0.0
    %667 = vmatpush.msra.mxu0 0.0
    %668 = vmatpush.msra.mxu0 0.0
    %669 = vmatpush.msra.mxu0 0.0
    %670 = vmatpush.msra.mxu0 0.0
    %671 = vmatpush.msra.mxu0 0.0
    %672 = vmatpush.msra.mxu0 0.0
    %673 = vmatpush.msra.mxu0 0.0
    %674 = vmatpush.msra.mxu0 0.0
    %675 = vmatpush.msra.mxu0 0.0
    %676 = vmatpush.msra.mxu0 0.0
    %677 = vmatpush.msra.mxu0 0.0
    %678 = vmatpush.msra.mxu0 %v658
    %679 = vmatmul.f32.gmra.mxu0 %v661
    %v680 = vpop.f32.mrf.mxu0
    %v681 = vadd.f32 0.0, %v680
    %682 = vdwg.mxu0
    %685 = vrot.lane.b32.xlu0 %v387, 8
    %v686 = vpop.permute.xlu0 %685
    %687 = vrot.lane.b32.xlu0 %v413, 8
    %v688 = vpop.permute.xlu0 %687
    %693 = vrot.lane.b32.xlu0 %v521, 16
    %v694 = vpop.permute.xlu0 %693
    %695 = vrot.lane.b32.xlu0 %v547, 16
    %v696 = vpop.permute.xlu0 %695
    %701 = vrot.lane.b32.xlu0 %v655, 24
    %v702 = vpop.permute.xlu0 %701
    %703 = vrot.lane.b32.xlu0 %v681, 24
    %v704 = vpop.permute.xlu0 %703
    %v707 = vsel %vm145, %v253, %v686
    %v708 = vsel %vm145, %v279, %v688
    %vm709 = vcmask 130048
    %v710 = vsel %vm709, %v707, %v694
    %v711 = vsel %vm709, %v708, %v696
    %vm712 = vcmask 195584
    %v713 = vsel %vm712, %v710, %v702
    %v714 = vsel %vm712, %v711, %v704
    %v715 = vld [vmem:[%s5] sm:$0xff]
    %v716 = vld [vmem:[%s5 + $0x8] sm:$0xff]
    %v717 = vld [vmem:[%s5 + $0x10] sm:$0xff]
    %v718 = vld [vmem:[%s5 + $0x18] sm:$0xff]
    %v719 = vperm.slane %v104, 0
    %v721 = vsel %vm46, %v713, 0
    %v724 = vsel %vm46, %v714, 0
    %726 = vmatpush.msra.mxu0 0.0
    %727 = vmatpush.msra.mxu0 0.0
    %728 = vmatpush.msra.mxu0 0.0
    %729 = vmatpush.msra.mxu0 0.0
    %730 = vmatpush.msra.mxu0 0.0
    %731 = vmatpush.msra.mxu0 0.0
    %732 = vmatpush.msra.mxu0 0.0
    %733 = vmatpush.msra.mxu0 0.0
    %734 = vmatpush.msra.mxu0 0.0
    %735 = vmatpush.msra.mxu0 0.0
    %736 = vmatpush.msra.mxu0 0.0
    %737 = vmatpush.msra.mxu0 0.0
    %738 = vmatpush.msra.mxu0 %v718
    %739 = vmatpush.msra.mxu0 %v717
    %740 = vmatpush.msra.mxu0 %v716
    %741 = vmatpush.msra.mxu0 %v715
    %742 = vmatmul.f32.gmra.mxu0 %v721
    %v743 = vpop.f32.mrf.mxu0
    %v744 = vadd.f32 %v719, %v743
    %745 = vmatmul.f32.gmra.mxu0 %v724
    %v746 = vpop.f32.mrf.mxu0
    %v747 = vadd.f32 %v719, %v746
    %748 = vdwg.mxu0
    %v749 = vadd.f32 %v102, %v744
    %v750 = vadd.f32 %v103, %v747
    %v751 = vsel %vm46, %v749, 0.0
    %752 = vadd.xlane.f32.xlu0 %v751
    %v753 = vpop.xlane.xlu0 %752
    %v754 = vsel %vm46, %v750, 0.0
    %755 = vadd.xlane.f32.xlu0 %v754
    %v756 = vpop.xlane.xlu0 %755
    %v757 = vmul.f32 %v753, %v59
    %v758 = vmul.f32 %v756, %v59
    %v759 = vsub.f32 %v749, %v757
    %v760 = vsub.f32 %v750, %v758
    %v761 = vmul.f32 %v759, %v759
    %v762 = vmul.f32 %v760, %v760
    %v763 = vsel %vm46, %v761, 0.0
    %764 = vadd.xlane.f32.xlu0 %v763
    %v765 = vpop.xlane.xlu0 %764
    %v766 = vsel %vm46, %v762, 0.0
    %767 = vadd.xlane.f32.xlu0 %v766
    %v768 = vpop.xlane.xlu0 %767
    %v769 = vmul.f32 %v765, %v59
    %v770 = vmul.f32 %v768, %v59
    %v771 = vadd.f32 %v769, 1e-12
    %v772 = vadd.f32 %v770, 1e-12
    %v773 = vrsqrt.pop %v771
    %v774 = vmul.f32 %v773, %v771
    %v775 = vmul.f32 %v774, %v773
    %v776 = vmul.f32 0.5, %v775
    %v777 = vsub.f32 1.5, %v776
    %v778 = vmul.f32 %v773, %v777
    %vm779 = vweird.f32 %v771
    %vm780 = vweird.f32 %v773
    %vm781 = vmor %vm779, %vm780
    %v782 = vsel %vm781, %v773, %v778
    %v783 = vrsqrt.pop %v772
    %v784 = vmul.f32 %v783, %v772
    %v785 = vmul.f32 %v784, %v783
    %v786 = vmul.f32 0.5, %v785
    %v787 = vsub.f32 1.5, %v786
    %v788 = vmul.f32 %v783, %v787
    %vm789 = vweird.f32 %v772
    %vm790 = vweird.f32 %v783
    %vm791 = vmor %vm789, %vm790
    %v792 = vsel %vm791, %v783, %v788
    %v793 = vmul.f32 %v759, %v782
    %v794 = vmul.f32 %v760, %v792
    %v795 = vperm.slane %v104, 1
    %v796 = vmul.f32 %v793, %v795
    %v797 = vmul.f32 %v794, %v795
    %v798 = vperm.slane %v104, 2
    %v799 = vadd.f32 %v796, %v798
    %v800 = vadd.f32 %v797, %v798
    %v801 = vld [vmem:[%s6] sm:$0xff]
    %v802 = vld [vmem:[%s6 + $0x8] sm:$0xff]
    %v803 = vld [vmem:[%s6 + $0x10] sm:$0xff]
    %v804 = vld [vmem:[%s6 + $0x18] sm:$0xff]
    %v805 = vld [vmem:[%s7] sm:$0x1]
    %v807 = vperm.slane %v805, 0
    %v810 = vsel %vm46, %v799, 0
    %v813 = vsel %vm46, %v800, 0
    %815 = vmatpush.msra.mxu0 0.0
    %816 = vmatpush.msra.mxu0 0.0
    %817 = vmatpush.msra.mxu0 0.0
    %818 = vmatpush.msra.mxu0 0.0
    %819 = vmatpush.msra.mxu0 0.0
    %820 = vmatpush.msra.mxu0 0.0
    %821 = vmatpush.msra.mxu0 0.0
    %822 = vmatpush.msra.mxu0 0.0
    %823 = vmatpush.msra.mxu0 0.0
    %824 = vmatpush.msra.mxu0 0.0
    %825 = vmatpush.msra.mxu0 0.0
    %826 = vmatpush.msra.mxu0 0.0
    %827 = vmatpush.msra.mxu0 %v804
    %828 = vmatpush.msra.mxu0 %v803
    %829 = vmatpush.msra.mxu0 %v802
    %830 = vmatpush.msra.mxu0 %v801
    %831 = vmatmul.f32.gmra.mxu0 %v810
    %v832 = vpop.f32.mrf.mxu0
    %v833 = vadd.f32 %v807, %v832
    %834 = vmatmul.f32.gmra.mxu0 %v813
    %v835 = vpop.f32.mrf.mxu0
    %v836 = vadd.f32 %v807, %v835
    %837 = vdwg.mxu0
    %v838 = vmul.f32 %v833, %v833
    %v839 = vmul.f32 %v836, %v836
    %v840 = vmul.f32 %v833, %v838
    %v841 = vmul.f32 %v836, %v839
    %v842 = vmul.f32 %v840, 0.044715
    %v843 = vmul.f32 %v841, 0.044715
    %v844 = vadd.f32 %v833, %v842
    %v845 = vadd.f32 %v836, %v843
    %v846 = vmul.f32 %v844, 0.7978846
    %v847 = vmul.f32 %v845, 0.7978846
    %v848 = vtanh.pop %v846
    %v849 = vtanh.pop %v847
    %v850 = vadd.f32 %v848, 1.0
    %v851 = vadd.f32 %v849, 1.0
    %v852 = vmul.f32 %v850, 0.5
    %v853 = vmul.f32 %v851, 0.5
    %v854 = vmul.f32 %v833, %v852
    %v855 = vmul.f32 %v836, %v853
    %v856 = vld [vmem:[%s8] sm:$0xff]
    %v857 = vld [vmem:[%s8 + $0x8] sm:$0xff]
    %v858 = vld [vmem:[%s8 + $0x10] sm:$0xff]
    %v859 = vld [vmem:[%s8 + $0x18] sm:$0xff]
    %v860 = vld [vmem:[%s8 + $0x20] sm:$0xff]
    %v861 = vld [vmem:[%s8 + $0x28] sm:$0xff]
    %v862 = vld [vmem:[%s8 + $0x30] sm:$0xff]
    %v863 = vld [vmem:[%s8 + $0x38] sm:$0xff]
    %v864 = vperm.slane %v104, 3
    %vm865 = vcmask 523264
    %v867 = vsel %vm865, %v854, 0
    %v870 = vsel %vm865, %v855, 0
    %872 = vmatpush.msra.mxu0 0.0
    %873 = vmatpush.msra.mxu0 0.0
    %874 = vmatpush.msra.mxu0 0.0
    %875 = vmatpush.msra.mxu0 0.0
    %876 = vmatpush.msra.mxu0 0.0
    %877 = vmatpush.msra.mxu0 0.0
    %878 = vmatpush.msra.mxu0 0.0
    %879 = vmatpush.msra.mxu0 0.0
    %880 = vmatpush.msra.mxu0 %v863
    %881 = vmatpush.msra.mxu0 %v862
    %882 = vmatpush.msra.mxu0 %v861
    %883 = vmatpush.msra.mxu0 %v860
    %884 = vmatpush.msra.mxu0 %v859
    %885 = vmatpush.msra.mxu0 %v858
    %886 = vmatpush.msra.mxu0 %v857
    %887 = vmatpush.msra.mxu0 %v856
    %888 = vmatmul.f32.gmra.mxu0 %v867
    %v889 = vpop.f32.mrf.mxu0
    %v890 = vadd.f32 %v864, %v889
    %891 = vmatmul.f32.gmra.mxu0 %v870
    %v892 = vpop.f32.mrf.mxu0
    %v893 = vadd.f32 %v864, %v892
    %894 = vdwg.mxu0
    %v895 = vadd.f32 %v799, %v890
    %v896 = vadd.f32 %v800, %v893
    %v897 = vsel %vm46, %v895, 0.0
    %898 = vadd.xlane.f32.xlu0 %v897
    %v899 = vpop.xlane.xlu0 %898
    %v900 = vsel %vm46, %v896, 0.0
    %901 = vadd.xlane.f32.xlu0 %v900
    %v902 = vpop.xlane.xlu0 %901
    %v903 = vmul.f32 %v899, %v59
    %v904 = vmul.f32 %v902, %v59
    %v905 = vsub.f32 %v895, %v903
    %v906 = vsub.f32 %v896, %v904
    %v907 = vmul.f32 %v905, %v905
    %v908 = vmul.f32 %v906, %v906
    %v909 = vsel %vm46, %v907, 0.0
    %910 = vadd.xlane.f32.xlu0 %v909
    %v911 = vpop.xlane.xlu0 %910
    %v912 = vsel %vm46, %v908, 0.0
    %913 = vadd.xlane.f32.xlu0 %v912
    %v914 = vpop.xlane.xlu0 %913
    %v915 = vmul.f32 %v911, %v59
    %v916 = vmul.f32 %v914, %v59
    %v917 = vadd.f32 %v915, 1e-12
    %v918 = vadd.f32 %v916, 1e-12
    %v919 = vrsqrt.pop %v917
    %v920 = vmul.f32 %v919, %v917
    %v921 = vmul.f32 %v920, %v919
    %v922 = vmul.f32 0.5, %v921
    %v923 = vsub.f32 1.5, %v922
    %v924 = vmul.f32 %v919, %v923
    %vm925 = vweird.f32 %v917
    %vm926 = vweird.f32 %v919
    %vm927 = vmor %vm925, %vm926
    %v928 = vsel %vm927, %v919, %v924
    %v929 = vrsqrt.pop %v918
    %v930 = vmul.f32 %v929, %v918
    %v931 = vmul.f32 %v930, %v929
    %v932 = vmul.f32 0.5, %v931
    %v933 = vsub.f32 1.5, %v932
    %v934 = vmul.f32 %v929, %v933
    %vm935 = vweird.f32 %v918
    %vm936 = vweird.f32 %v929
    %vm937 = vmor %vm935, %vm936
    %v938 = vsel %vm937, %v929, %v934
    %v939 = vmul.f32 %v905, %v928
    %v940 = vmul.f32 %v906, %v938
    %v941 = vperm.slane %v104, 4
    %v942 = vmul.f32 %v939, %v941
    %v943 = vmul.f32 %v940, %v941
    %v944 = vperm.slane %v104, 5
    %v945 = vadd.f32 %v942, %v944
    %v946 = vadd.f32 %v943, %v944
    %s947 = scalar_lea.vmem %s9, 8
    %v948 = vld [vmem:[%s947] sm:$0x3f]
    %s949 = scalar_lea.vmem %s3, 32
    %v950 = vld [vmem:[%s949] sm:$0xff]
    %v951 = vld [vmem:[%s949 + $0x8] sm:$0xff]
    %v952 = vld [vmem:[%s949 + $0x10] sm:$0xff]
    %v953 = vld [vmem:[%s949 + $0x18] sm:$0xff]
    %s954 = scalar_lea.vmem %s4, 1
    %v955 = vld [vmem:[%s954] sm:$0x1]
    %v957 = vperm.slane %v955, 0
    %v960 = vsel %vm46, %v945, 0
    %v963 = vsel %vm46, %v946, 0
    %965 = vmatpush.msra.mxu0 0.0
    %966 = vmatpush.msra.mxu0 0.0
    %967 = vmatpush.msra.mxu0 0.0
    %968 = vmatpush.msra.mxu0 0.0
    %969 = vmatpush.msra.mxu0 0.0
    %970 = vmatpush.msra.mxu0 0.0
    %971 = vmatpush.msra.mxu0 0.0
    %972 = vmatpush.msra.mxu0 0.0
    %973 = vmatpush.msra.mxu0 0.0
    %974 = vmatpush.msra.mxu0 0.0
    %975 = vmatpush.msra.mxu0 0.0
    %976 = vmatpush.msra.mxu0 0.0
    %977 = vmatpush.msra.mxu0 %v953
    %978 = vmatpush.msra.mxu0 %v952
    %979 = vmatpush.msra.mxu0 %v951
    %980 = vmatpush.msra.mxu0 %v950
    %981 = vmatmul.f32.gmra.mxu0 %v960
    %v982 = vpop.f32.mrf.mxu0
    %v983 = vadd.f32 %v957, %v982
    %984 = vmatmul.f32.gmra.mxu0 %v963
    %v985 = vpop.f32.mrf.mxu0
    %v986 = vadd.f32 %v957, %v985
    %987 = vdwg.mxu0
    %989 = vrot.lane.b32.xlu0 %v983, 96
    %v990 = vpop.permute.xlu0 %989
    %v991 = vsel %vm145, %v983, 0
    %v993 = vsel %vm145, %v990, 0
    %995 = vmatpush.xpose.msra.mxu0 0.0
    %996 = vmatpush.xpose.msra.mxu0 0.0
    %997 = vmatpush.xpose.msra.mxu0 0.0
    %998 = vmatpush.xpose.msra.mxu0 0.0
    %999 = vmatpush.xpose.msra.mxu0 0.0
    %1000 = vmatpush.xpose.msra.mxu0 0.0
    %1001 = vmatpush.xpose.msra.mxu0 0.0
    %1002 = vmatpush.xpose.msra.mxu0 0.0
    %1003 = vmatpush.xpose.msra.mxu0 0.0
    %1004 = vmatpush.xpose.msra.mxu0 0.0
    %1005 = vmatpush.xpose.msra.mxu0 0.0
    %1006 = vmatpush.xpose.msra.mxu0 0.0
    %1007 = vmatpush.xpose.msra.mxu0 0.0
    %1008 = vmatpush.xpose.msra.mxu0 0.0
    %1009 = vmatpush.xpose.msra.mxu0 0.0
    %1010 = vmatpush.xpose.msra.mxu0 %v993
    %1011 = vmatmul.f32.gmra.mxu0 %v991
    %v1012 = vpop.f32.mrf.mxu0
    %v1013 = vadd.f32 0.0, %v1012
    %1014 = vdwg.mxu0
    %1016 = vrot.lane.b32.xlu0 %v986, 96
    %v1017 = vpop.permute.xlu0 %1016
    %v1018 = vsel %vm145, %v986, 0
    %v1020 = vsel %vm145, %v1017, 0
    %1022 = vmatpush.xpose.msra.mxu0 0.0
    %1023 = vmatpush.xpose.msra.mxu0 0.0
    %1024 = vmatpush.xpose.msra.mxu0 0.0
    %1025 = vmatpush.xpose.msra.mxu0 0.0
    %1026 = vmatpush.xpose.msra.mxu0 0.0
    %1027 = vmatpush.xpose.msra.mxu0 0.0
    %1028 = vmatpush.xpose.msra.mxu0 0.0
    %1029 = vmatpush.xpose.msra.mxu0 0.0
    %1030 = vmatpush.xpose.msra.mxu0 0.0
    %1031 = vmatpush.xpose.msra.mxu0 0.0
    %1032 = vmatpush.xpose.msra.mxu0 0.0
    %1033 = vmatpush.xpose.msra.mxu0 0.0
    %1034 = vmatpush.xpose.msra.mxu0 0.0
    %1035 = vmatpush.xpose.msra.mxu0 0.0
    %1036 = vmatpush.xpose.msra.mxu0 0.0
    %1037 = vmatpush.xpose.msra.mxu0 %v1020
    %1038 = vmatmul.f32.gmra.mxu0 %v1018
    %v1039 = vpop.f32.mrf.mxu0
    %v1040 = vadd.f32 0.0, %v1039
    %1041 = vdwg.mxu0
    %v1042 = vmul.f32 %v1013, 0.35355338
    %v1043 = vmul.f32 %v1040, 0.35355338
    %v1044 = vadd.f32 %v1042, %v201
    %v1045 = vadd.f32 %v1043, %v202
    %v1046 = vsel %vm145, %v1044, -inf
    %1047 = vmax.xlane.f32.xlu0 %v1046
    %v1048 = vpop.xlane.xlu0 %1047
    %v1049 = vsel %vm145, %v1045, -inf
    %1050 = vmax.xlane.f32.xlu0 %v1049
    %v1051 = vpop.xlane.xlu0 %1050
    %v1052 = vsub.f32 %v1044, %v1048
    %v1053 = vsub.f32 %v1045, %v1051
    %v1054 = vmul.f32 %v1052, 1.442695
    %v1055 = vpow.pop %v1054
    %v1056 = vmul.f32 %v1053, 1.442695
    %v1057 = vpow.pop %v1056
    %v1058 = vsel %vm145, %v1055, 0.0
    %1059 = vadd.xlane.f32.xlu0 %v1058
    %v1060 = vpop.xlane.xlu0 %1059
    %v1061 = vsel %vm145, %v1057, 0.0
    %1062 = vadd.xlane.f32.xlu0 %v1061
    %v1063 = vpop.xlane.xlu0 %1062
    %v1064 = vrcp.pop %v1060
    %v1065 = vrcp.pop %v1063
    %v1066 = vmul.f32 %v1055, %v1064
    %v1067 = vmul.f32 %v1057, %v1065
    %1068 = vrot.lane.b32.xlu0 %v983, 64
    %v1069 = vpop.permute.xlu0 %1068
    %v1072 = vsel %vm145, %v1066, 0
    %1074 = vmatpush.msra.mxu0 0.0
    %1075 = vmatpush.msra.mxu0 0.0
    %1076 = vmatpush.msra.mxu0 0.0
    %1077 = vmatpush.msra.mxu0 0.0
    %1078 = vmatpush.msra.mxu0 0.0
    %1079 = vmatpush.msra.mxu0 0.0
    %1080 = vmatpush.msra.mxu0 0.0
    %1081 = vmatpush.msra.mxu0 0.0
    %1082 = vmatpush.msra.mxu0 0.0
    %1083 = vmatpush.msra.mxu0 0.0
    %1084 = vmatpush.msra.mxu0 0.0
    %1085 = vmatpush.msra.mxu0 0.0
    %1086 = vmatpush.msra.mxu0 0.0
    %1087 = vmatpush.msra.mxu0 0.0
    %1088 = vmatpush.msra.mxu0 0.0
    %1089 = vmatpush.msra.mxu0 %v1069
    %1090 = vmatmul.f32.gmra.mxu0 %v1072
    %v1091 = vpop.f32.mrf.mxu0
    %v1092 = vadd.f32 0.0, %v1091
    %1093 = vdwg.mxu0
    %1094 = vrot.lane.b32.xlu0 %v986, 64
    %v1095 = vpop.permute.xlu0 %1094
    %v1098 = vsel %vm145, %v1067, 0
    %1100 = vmatpush.msra.mxu0 0.0
    %1101 = vmatpush.msra.mxu0 0.0
    %1102 = vmatpush.msra.mxu0 0.0
    %1103 = vmatpush.msra.mxu0 0.0
    %1104 = vmatpush.msra.mxu0 0.0
    %1105 = vmatpush.msra.mxu0 0.0
    %1106 = vmatpush.msra.mxu0 0.0
    %1107 = vmatpush.msra.mxu0 0.0
    %1108 = vmatpush.msra.mxu0 0.0
    %1109 = vmatpush.msra.mxu0 0.0
    %1110 = vmatpush.msra.mxu0 0.0
    %1111 = vmatpush.msra.mxu0 0.0
    %1112 = vmatpush.msra.mxu0 0.0
    %1113 = vmatpush.msra.mxu0 0.0
    %1114 = vmatpush.msra.mxu0 0.0
    %1115 = vmatpush.msra.mxu0 %v1095
    %1116 = vmatmul.f32.gmra.mxu0 %v1098
    %v1117 = vpop.f32.mrf.mxu0
    %v1118 = vadd.f32 0.0, %v1117
    %1119 = vdwg.mxu0
    %1120 = vrot.lane.b32.xlu0 %v983, 120
    %v1121 = vpop.permute.xlu0 %1120
    %1122 = vrot.lane.b32.xlu0 %v983, 88
    %v1123 = vpop.permute.xlu0 %1122
    %v1124 = vsel %vm145, %v1121, 0
    %v1126 = vsel %vm145, %v1123, 0
    %1128 = vmatpush.xpose.msra.mxu0 0.0
    %1129 = vmatpush.xpose.msra.mxu0 0.0
    %1130 = vmatpush.xpose.msra.mxu0 0.0
    %1131 = vmatpush.xpose.msra.mxu0 0.0
    %1132 = vmatpush.xpose.msra.mxu0 0.0
    %1133 = vmatpush.xpose.msra.mxu0 0.0
    %1134 = vmatpush.xpose.msra.mxu0 0.0
    %1135 = vmatpush.xpose.msra.mxu0 0.0
    %1136 = vmatpush.xpose.msra.mxu0 0.0
    %1137 = vmatpush.xpose.msra.mxu0 0.0
    %1138 = vmatpush.xpose.msra.mxu0 0.0
    %1139 = vmatpush.xpose.msra.mxu0 0.0
    %1140 = vmatpush.xpose.msra.mxu0 0.0
    %1141 = vmatpush.xpose.msra.mxu0 0.0
    %1142 = vmatpush.xpose.msra.mxu0 0.0
    %1143 = vmatpush.xpose.msra.mxu0 %v1126
    %1144 = vmatmul.f32.gmra.mxu0 %v1124
    %v1145 = vpop.f32.mrf.mxu0
    %v1146 = vadd.f32 0.0, %v1145
    %1147 = vdwg.mxu0
    %1148 = vrot.lane.b32.xlu0 %v986, 120
    %v1149 = vpop.permute.xlu0 %1148
    %1150 = vrot.lane.b32.xlu0 %v986, 88
    %v1151 = vpop.permute.xlu0 %1150
    %v1152 = vsel %vm145, %v1149, 0
    %v1154 = vsel %vm145, %v1151, 0
    %1156 = vmatpush.xpose.msra.mxu0 0.0
    %1157 = vmatpush.xpose.msra.mxu0 0.0
    %1158 = vmatpush.xpose.msra.mxu0 0.0
    %1159 = vmatpush.xpose.msra.mxu0 0.0
    %1160 = vmatpush.xpose.msra.mxu0 0.0
    %1161 = vmatpush.xpose.msra.mxu0 0.0
    %1162 = vmatpush.xpose.msra.mxu0 0.0
    %1163 = vmatpush.xpose.msra.mxu0 0.0
    %1164 = vmatpush.xpose.msra.mxu0 0.0
    %1165 = vmatpush.xpose.msra.mxu0 0.0
    %1166 = vmatpush.xpose.msra.mxu0 0.0
    %1167 = vmatpush.xpose.msra.mxu0 0.0
    %1168 = vmatpush.xpose.msra.mxu0 0.0
    %1169 = vmatpush.xpose.msra.mxu0 0.0
    %1170 = vmatpush.xpose.msra.mxu0 0.0
    %1171 = vmatpush.xpose.msra.mxu0 %v1154
    %1172 = vmatmul.f32.gmra.mxu0 %v1152
    %v1173 = vpop.f32.mrf.mxu0
    %v1174 = vadd.f32 0.0, %v1173
    %1175 = vdwg.mxu0
    %v1176 = vmul.f32 %v1146, 0.35355338
    %v1177 = vmul.f32 %v1174, 0.35355338
    %v1178 = vadd.f32 %v1176, %v201
    %v1179 = vadd.f32 %v1177, %v202
    %v1180 = vsel %vm145, %v1178, -inf
    %1181 = vmax.xlane.f32.xlu0 %v1180
    %v1182 = vpop.xlane.xlu0 %1181
    %v1183 = vsel %vm145, %v1179, -inf
    %1184 = vmax.xlane.f32.xlu0 %v1183
    %v1185 = vpop.xlane.xlu0 %1184
    %v1186 = vsub.f32 %v1178, %v1182
    %v1187 = vsub.f32 %v1179, %v1185
    %v1188 = vmul.f32 %v1186, 1.442695
    %v1189 = vpow.pop %v1188
    %v1190 = vmul.f32 %v1187, 1.442695
    %v1191 = vpow.pop %v1190
    %v1192 = vsel %vm145, %v1189, 0.0
    %1193 = vadd.xlane.f32.xlu0 %v1192
    %v1194 = vpop.xlane.xlu0 %1193
    %v1195 = vsel %vm145, %v1191, 0.0
    %1196 = vadd.xlane.f32.xlu0 %v1195
    %v1197 = vpop.xlane.xlu0 %1196
    %v1198 = vrcp.pop %v1194
    %v1199 = vrcp.pop %v1197
    %v1200 = vmul.f32 %v1189, %v1198
    %v1201 = vmul.f32 %v1191, %v1199
    %1202 = vrot.lane.b32.xlu0 %v983, 56
    %v1203 = vpop.permute.xlu0 %1202
    %v1206 = vsel %vm145, %v1200, 0
    %1208 = vmatpush.msra.mxu0 0.0
    %1209 = vmatpush.msra.mxu0 0.0
    %1210 = vmatpush.msra.mxu0 0.0
    %1211 = vmatpush.msra.mxu0 0.0
    %1212 = vmatpush.msra.mxu0 0.0
    %1213 = vmatpush.msra.mxu0 0.0
    %1214 = vmatpush.msra.mxu0 0.0
    %1215 = vmatpush.msra.mxu0 0.0
    %1216 = vmatpush.msra.mxu0 0.0
    %1217 = vmatpush.msra.mxu0 0.0
    %1218 = vmatpush.msra.mxu0 0.0
    %1219 = vmatpush.msra.mxu0 0.0
    %1220 = vmatpush.msra.mxu0 0.0
    %1221 = vmatpush.msra.mxu0 0.0
    %1222 = vmatpush.msra.mxu0 0.0
    %1223 = vmatpush.msra.mxu0 %v1203
    %1224 = vmatmul.f32.gmra.mxu0 %v1206
    %v1225 = vpop.f32.mrf.mxu0
    %v1226 = vadd.f32 0.0, %v1225
    %1227 = vdwg.mxu0
    %1228 = vrot.lane.b32.xlu0 %v986, 56
    %v1229 = vpop.permute.xlu0 %1228
    %v1232 = vsel %vm145, %v1201, 0
    %1234 = vmatpush.msra.mxu0 0.0
    %1235 = vmatpush.msra.mxu0 0.0
    %1236 = vmatpush.msra.mxu0 0.0
    %1237 = vmatpush.msra.mxu0 0.0
    %1238 = vmatpush.msra.mxu0 0.0
    %1239 = vmatpush.msra.mxu0 0.0
    %1240 = vmatpush.msra.mxu0 0.0
    %1241 = vmatpush.msra.mxu0 0.0
    %1242 = vmatpush.msra.mxu0 0.0
    %1243 = vmatpush.msra.mxu0 0.0
    %1244 = vmatpush.msra.mxu0 0.0
    %1245 = vmatpush.msra.mxu0 0.0
    %1246 = vmatpush.msra.mxu0 0.0
    %1247 = vmatpush.msra.mxu0 0.0
    %1248 = vmatpush.msra.mxu0 0.0
    %1249 = vmatpush.msra.mxu0 %v1229
    %1250 = vmatmul.f32.gmra.mxu0 %v1232
    %v1251 = vpop.f32.mrf.mxu0
    %v1252 = vadd.f32 0.0, %v1251
    %1253 = vdwg.mxu0
    %1254 = vrot.lane.b32.xlu0 %v983, 112
    %v1255 = vpop.permute.xlu0 %1254
    %1256 = vrot.lane.b32.xlu0 %v983, 80
    %v1257 = vpop.permute.xlu0 %1256
    %v1258 = vsel %vm145, %v1255, 0
    %v1260 = vsel %vm145, %v1257, 0
    %1262 = vmatpush.xpose.msra.mxu0 0.0
    %1263 = vmatpush.xpose.msra.mxu0 0.0
    %1264 = vmatpush.xpose.msra.mxu0 0.0
    %1265 = vmatpush.xpose.msra.mxu0 0.0
    %1266 = vmatpush.xpose.msra.mxu0 0.0
    %1267 = vmatpush.xpose.msra.mxu0 0.0
    %1268 = vmatpush.xpose.msra.mxu0 0.0
    %1269 = vmatpush.xpose.msra.mxu0 0.0
    %1270 = vmatpush.xpose.msra.mxu0 0.0
    %1271 = vmatpush.xpose.msra.mxu0 0.0
    %1272 = vmatpush.xpose.msra.mxu0 0.0
    %1273 = vmatpush.xpose.msra.mxu0 0.0
    %1274 = vmatpush.xpose.msra.mxu0 0.0
    %1275 = vmatpush.xpose.msra.mxu0 0.0
    %1276 = vmatpush.xpose.msra.mxu0 0.0
    %1277 = vmatpush.xpose.msra.mxu0 %v1260
    %1278 = vmatmul.f32.gmra.mxu0 %v1258
    %v1279 = vpop.f32.mrf.mxu0
    %v1280 = vadd.f32 0.0, %v1279
    %1281 = vdwg.mxu0
    %1282 = vrot.lane.b32.xlu0 %v986, 112
    %v1283 = vpop.permute.xlu0 %1282
    %1284 = vrot.lane.b32.xlu0 %v986, 80
    %v1285 = vpop.permute.xlu0 %1284
    %v1286 = vsel %vm145, %v1283, 0
    %v1288 = vsel %vm145, %v1285, 0
    %1290 = vmatpush.xpose.msra.mxu0 0.0
    %1291 = vmatpush.xpose.msra.mxu0 0.0
    %1292 = vmatpush.xpose.msra.mxu0 0.0
    %1293 = vmatpush.xpose.msra.mxu0 0.0
    %1294 = vmatpush.xpose.msra.mxu0 0.0
    %1295 = vmatpush.xpose.msra.mxu0 0.0
    %1296 = vmatpush.xpose.msra.mxu0 0.0
    %1297 = vmatpush.xpose.msra.mxu0 0.0
    %1298 = vmatpush.xpose.msra.mxu0 0.0
    %1299 = vmatpush.xpose.msra.mxu0 0.0
    %1300 = vmatpush.xpose.msra.mxu0 0.0
    %1301 = vmatpush.xpose.msra.mxu0 0.0
    %1302 = vmatpush.xpose.msra.mxu0 0.0
    %1303 = vmatpush.xpose.msra.mxu0 0.0
    %1304 = vmatpush.xpose.msra.mxu0 0.0
    %1305 = vmatpush.xpose.msra.mxu0 %v1288
    %1306 = vmatmul.f32.gmra.mxu0 %v1286
    %v1307 = vpop.f32.mrf.mxu0
    %v1308 = vadd.f32 0.0, %v1307
    %1309 = vdwg.mxu0
    %v1310 = vmul.f32 %v1280, 0.35355338
    %v1311 = vmul.f32 %v1308, 0.35355338
    %v1312 = vadd.f32 %v1310, %v201
    %v1313 = vadd.f32 %v1311, %v202
    %v1314 = vsel %vm145, %v1312, -inf
    %1315 = vmax.xlane.f32.xlu0 %v1314
    %v1316 = vpop.xlane.xlu0 %1315
    %v1317 = vsel %vm145, %v1313, -inf
    %1318 = vmax.xlane.f32.xlu0 %v1317
    %v1319 = vpop.xlane.xlu0 %1318
    %v1320 = vsub.f32 %v1312, %v1316
    %v1321 = vsub.f32 %v1313, %v1319
    %v1322 = vmul.f32 %v1320, 1.442695
    %v1323 = vpow.pop %v1322
    %v1324 = vmul.f32 %v1321, 1.442695
    %v1325 = vpow.pop %v1324
    %v1326 = vsel %vm145, %v1323, 0.0
    %1327 = vadd.xlane.f32.xlu0 %v1326
    %v1328 = vpop.xlane.xlu0 %1327
    %v1329 = vsel %vm145, %v1325, 0.0
    %1330 = vadd.xlane.f32.xlu0 %v1329
    %v1331 = vpop.xlane.xlu0 %1330
    %v1332 = vrcp.pop %v1328
    %v1333 = vrcp.pop %v1331
    %v1334 = vmul.f32 %v1323, %v1332
    %v1335 = vmul.f32 %v1325, %v1333
    %1336 = vrot.lane.b32.xlu0 %v983, 48
    %v1337 = vpop.permute.xlu0 %1336
    %v1340 = vsel %vm145, %v1334, 0
    %1342 = vmatpush.msra.mxu0 0.0
    %1343 = vmatpush.msra.mxu0 0.0
    %1344 = vmatpush.msra.mxu0 0.0
    %1345 = vmatpush.msra.mxu0 0.0
    %1346 = vmatpush.msra.mxu0 0.0
    %1347 = vmatpush.msra.mxu0 0.0
    %1348 = vmatpush.msra.mxu0 0.0
    %1349 = vmatpush.msra.mxu0 0.0
    %1350 = vmatpush.msra.mxu0 0.0
    %1351 = vmatpush.msra.mxu0 0.0
    %1352 = vmatpush.msra.mxu0 0.0
    %1353 = vmatpush.msra.mxu0 0.0
    %1354 = vmatpush.msra.mxu0 0.0
    %1355 = vmatpush.msra.mxu0 0.0
    %1356 = vmatpush.msra.mxu0 0.0
    %1357 = vmatpush.msra.mxu0 %v1337
    %1358 = vmatmul.f32.gmra.mxu0 %v1340
    %v1359 = vpop.f32.mrf.mxu0
    %v1360 = vadd.f32 0.0, %v1359
    %1361 = vdwg.mxu0
    %1362 = vrot.lane.b32.xlu0 %v986, 48
    %v1363 = vpop.permute.xlu0 %1362
    %v1366 = vsel %vm145, %v1335, 0
    %1368 = vmatpush.msra.mxu0 0.0
    %1369 = vmatpush.msra.mxu0 0.0
    %1370 = vmatpush.msra.mxu0 0.0
    %1371 = vmatpush.msra.mxu0 0.0
    %1372 = vmatpush.msra.mxu0 0.0
    %1373 = vmatpush.msra.mxu0 0.0
    %1374 = vmatpush.msra.mxu0 0.0
    %1375 = vmatpush.msra.mxu0 0.0
    %1376 = vmatpush.msra.mxu0 0.0
    %1377 = vmatpush.msra.mxu0 0.0
    %1378 = vmatpush.msra.mxu0 0.0
    %1379 = vmatpush.msra.mxu0 0.0
    %1380 = vmatpush.msra.mxu0 0.0
    %1381 = vmatpush.msra.mxu0 0.0
    %1382 = vmatpush.msra.mxu0 0.0
    %1383 = vmatpush.msra.mxu0 %v1363
    %1384 = vmatmul.f32.gmra.mxu0 %v1366
    %v1385 = vpop.f32.mrf.mxu0
    %v1386 = vadd.f32 0.0, %v1385
    %1387 = vdwg.mxu0
    %1388 = vrot.lane.b32.xlu0 %v983, 104
    %v1389 = vpop.permute.xlu0 %1388
    %1390 = vrot.lane.b32.xlu0 %v983, 72
    %v1391 = vpop.permute.xlu0 %1390
    %v1392 = vsel %vm145, %v1389, 0
    %v1394 = vsel %vm145, %v1391, 0
    %1396 = vmatpush.xpose.msra.mxu0 0.0
    %1397 = vmatpush.xpose.msra.mxu0 0.0
    %1398 = vmatpush.xpose.msra.mxu0 0.0
    %1399 = vmatpush.xpose.msra.mxu0 0.0
    %1400 = vmatpush.xpose.msra.mxu0 0.0
    %1401 = vmatpush.xpose.msra.mxu0 0.0
    %1402 = vmatpush.xpose.msra.mxu0 0.0
    %1403 = vmatpush.xpose.msra.mxu0 0.0
    %1404 = vmatpush.xpose.msra.mxu0 0.0
    %1405 = vmatpush.xpose.msra.mxu0 0.0
    %1406 = vmatpush.xpose.msra.mxu0 0.0
    %1407 = vmatpush.xpose.msra.mxu0 0.0
    %1408 = vmatpush.xpose.msra.mxu0 0.0
    %1409 = vmatpush.xpose.msra.mxu0 0.0
    %1410 = vmatpush.xpose.msra.mxu0 0.0
    %1411 = vmatpush.xpose.msra.mxu0 %v1394
    %1412 = vmatmul.f32.gmra.mxu0 %v1392
    %v1413 = vpop.f32.mrf.mxu0
    %v1414 = vadd.f32 0.0, %v1413
    %1415 = vdwg.mxu0
    %1416 = vrot.lane.b32.xlu0 %v986, 104
    %v1417 = vpop.permute.xlu0 %1416
    %1418 = vrot.lane.b32.xlu0 %v986, 72
    %v1419 = vpop.permute.xlu0 %1418
    %v1420 = vsel %vm145, %v1417, 0
    %v1422 = vsel %vm145, %v1419, 0
    %1424 = vmatpush.xpose.msra.mxu0 0.0
    %1425 = vmatpush.xpose.msra.mxu0 0.0
    %1426 = vmatpush.xpose.msra.mxu0 0.0
    %1427 = vmatpush.xpose.msra.mxu0 0.0
    %1428 = vmatpush.xpose.msra.mxu0 0.0
    %1429 = vmatpush.xpose.msra.mxu0 0.0
    %1430 = vmatpush.xpose.msra.mxu0 0.0
    %1431 = vmatpush.xpose.msra.mxu0 0.0
    %1432 = vmatpush.xpose.msra.mxu0 0.0
    %1433 = vmatpush.xpose.msra.mxu0 0.0
    %1434 = vmatpush.xpose.msra.mxu0 0.0
    %1435 = vmatpush.xpose.msra.mxu0 0.0
    %1436 = vmatpush.xpose.msra.mxu0 0.0
    %1437 = vmatpush.xpose.msra.mxu0 0.0
    %1438 = vmatpush.xpose.msra.mxu0 0.0
    %1439 = vmatpush.xpose.msra.mxu0 %v1422
    %1440 = vmatmul.f32.gmra.mxu0 %v1420
    %v1441 = vpop.f32.mrf.mxu0
    %v1442 = vadd.f32 0.0, %v1441
    %1443 = vdwg.mxu0
    %v1444 = vmul.f32 %v1414, 0.35355338
    %v1445 = vmul.f32 %v1442, 0.35355338
    %v1446 = vadd.f32 %v1444, %v201
    %v1447 = vadd.f32 %v1445, %v202
    %v1448 = vsel %vm145, %v1446, -inf
    %1449 = vmax.xlane.f32.xlu0 %v1448
    %v1450 = vpop.xlane.xlu0 %1449
    %v1451 = vsel %vm145, %v1447, -inf
    %1452 = vmax.xlane.f32.xlu0 %v1451
    %v1453 = vpop.xlane.xlu0 %1452
    %v1454 = vsub.f32 %v1446, %v1450
    %v1455 = vsub.f32 %v1447, %v1453
    %v1456 = vmul.f32 %v1454, 1.442695
    %v1457 = vpow.pop %v1456
    %v1458 = vmul.f32 %v1455, 1.442695
    %v1459 = vpow.pop %v1458
    %v1460 = vsel %vm145, %v1457, 0.0
    %1461 = vadd.xlane.f32.xlu0 %v1460
    %v1462 = vpop.xlane.xlu0 %1461
    %v1463 = vsel %vm145, %v1459, 0.0
    %1464 = vadd.xlane.f32.xlu0 %v1463
    %v1465 = vpop.xlane.xlu0 %1464
    %v1466 = vrcp.pop %v1462
    %v1467 = vrcp.pop %v1465
    %v1468 = vmul.f32 %v1457, %v1466
    %v1469 = vmul.f32 %v1459, %v1467
    %1470 = vrot.lane.b32.xlu0 %v983, 40
    %v1471 = vpop.permute.xlu0 %1470
    %v1474 = vsel %vm145, %v1468, 0
    %1476 = vmatpush.msra.mxu0 0.0
    %1477 = vmatpush.msra.mxu0 0.0
    %1478 = vmatpush.msra.mxu0 0.0
    %1479 = vmatpush.msra.mxu0 0.0
    %1480 = vmatpush.msra.mxu0 0.0
    %1481 = vmatpush.msra.mxu0 0.0
    %1482 = vmatpush.msra.mxu0 0.0
    %1483 = vmatpush.msra.mxu0 0.0
    %1484 = vmatpush.msra.mxu0 0.0
    %1485 = vmatpush.msra.mxu0 0.0
    %1486 = vmatpush.msra.mxu0 0.0
    %1487 = vmatpush.msra.mxu0 0.0
    %1488 = vmatpush.msra.mxu0 0.0
    %1489 = vmatpush.msra.mxu0 0.0
    %1490 = vmatpush.msra.mxu0 0.0
    %1491 = vmatpush.msra.mxu0 %v1471
    %1492 = vmatmul.f32.gmra.mxu0 %v1474
    %v1493 = vpop.f32.mrf.mxu0
    %v1494 = vadd.f32 0.0, %v1493
    %1495 = vdwg.mxu0
    %1496 = vrot.lane.b32.xlu0 %v986, 40
    %v1497 = vpop.permute.xlu0 %1496
    %v1500 = vsel %vm145, %v1469, 0
    %1502 = vmatpush.msra.mxu0 0.0
    %1503 = vmatpush.msra.mxu0 0.0
    %1504 = vmatpush.msra.mxu0 0.0
    %1505 = vmatpush.msra.mxu0 0.0
    %1506 = vmatpush.msra.mxu0 0.0
    %1507 = vmatpush.msra.mxu0 0.0
    %1508 = vmatpush.msra.mxu0 0.0
    %1509 = vmatpush.msra.mxu0 0.0
    %1510 = vmatpush.msra.mxu0 0.0
    %1511 = vmatpush.msra.mxu0 0.0
    %1512 = vmatpush.msra.mxu0 0.0
    %1513 = vmatpush.msra.mxu0 0.0
    %1514 = vmatpush.msra.mxu0 0.0
    %1515 = vmatpush.msra.mxu0 0.0
    %1516 = vmatpush.msra.mxu0 0.0
    %1517 = vmatpush.msra.mxu0 %v1497
    %1518 = vmatmul.f32.gmra.mxu0 %v1500
    %v1519 = vpop.f32.mrf.mxu0
    %v1520 = vadd.f32 0.0, %v1519
    %1521 = vdwg.mxu0
    %1524 = vrot.lane.b32.xlu0 %v1226, 8
    %v1525 = vpop.permute.xlu0 %1524
    %1526 = vrot.lane.b32.xlu0 %v1252, 8
    %v1527 = vpop.permute.xlu0 %1526
    %1532 = vrot.lane.b32.xlu0 %v1360, 16
    %v1533 = vpop.permute.xlu0 %1532
    %1534 = vrot.lane.b32.xlu0 %v1386, 16
    %v1535 = vpop.permute.xlu0 %1534
    %1540 = vrot.lane.b32.xlu0 %v1494, 24
    %v1541 = vpop.permute.xlu0 %1540
    %1542 = vrot.lane.b32.xlu0 %v1520, 24
    %v1543 = vpop.permute.xlu0 %1542
    %v1546 = vsel %vm145, %v1092, %v1525
    %v1547 = vsel %vm145, %v1118, %v1527
    %v1548 = vsel %vm709, %v1546, %v1533
    %v1549 = vsel %vm709, %v1547, %v1535
    %v1550 = vsel %vm712, %v1548, %v1541
    %v1551 = vsel %vm712, %v1549, %v1543
    %s1552 = scalar_lea.vmem %s5, 32
    %v1553 = vld [vmem:[%s1552] sm:$0xff]
    %v1554 = vld [vmem:[%s1552 + $0x8] sm:$0xff]
    %v1555 = vld [vmem:[%s1552 + $0x10] sm:$0xff]
    %v1556 = vld [vmem:[%s1552 + $0x18] sm:$0xff]
    %v1557 = vperm.slane %v948, 0
    %v1559 = vsel %vm46, %v1550, 0
    %v1562 = vsel %vm46, %v1551, 0
    %1564 = vmatpush.msra.mxu0 0.0
    %1565 = vmatpush.msra.mxu0 0.0
    %1566 = vmatpush.msra.mxu0 0.0
    %1567 = vmatpush.msra.mxu0 0.0
    %1568 = vmatpush.msra.mxu0 0.0
    %1569 = vmatpush.msra.mxu0 0.0
    %1570 = vmatpush.msra.mxu0 0.0
    %1571 = vmatpush.msra.mxu0 0.0
    %1572 = vmatpush.msra.mxu0 0.0
    %1573 = vmatpush.msra.mxu0 0.0
    %1574 = vmatpush.msra.mxu0 0.0
    %1575 = vmatpush.msra.mxu0 0.0
    %1576 = vmatpush.msra.mxu0 %v1556
    %1577 = vmatpush.msra.mxu0 %v1555
    %1578 = vmatpush.msra.mxu0 %v1554
    %1579 = vmatpush.msra.mxu0 %v1553
    %1580 = vmatmul.f32.gmra.mxu0 %v1559
    %v1581 = vpop.f32.mrf.mxu0
    %v1582 = vadd.f32 %v1557, %v1581
    %1583 = vmatmul.f32.gmra.mxu0 %v1562
    %v1584 = vpop.f32.mrf.mxu0
    %v1585 = vadd.f32 %v1557, %v1584
    %1586 = vdwg.mxu0
    %v1587 = vadd.f32 %v945, %v1582
    %v1588 = vadd.f32 %v946, %v1585
    %v1589 = vsel %vm46, %v1587, 0.0
    %1590 = vadd.xlane.f32.xlu0 %v1589
    %v1591 = vpop.xlane.xlu0 %1590
    %v1592 = vsel %vm46, %v1588, 0.0
    %1593 = vadd.xlane.f32.xlu0 %v1592
    %v1594 = vpop.xlane.xlu0 %1593
    %v1595 = vmul.f32 %v1591, %v59
    %v1596 = vmul.f32 %v1594, %v59
    %v1597 = vsub.f32 %v1587, %v1595
    %v1598 = vsub.f32 %v1588, %v1596
    %v1599 = vmul.f32 %v1597, %v1597
    %v1600 = vmul.f32 %v1598, %v1598
    %v1601 = vsel %vm46, %v1599, 0.0
    %1602 = vadd.xlane.f32.xlu0 %v1601
    %v1603 = vpop.xlane.xlu0 %1602
    %v1604 = vsel %vm46, %v1600, 0.0
    %1605 = vadd.xlane.f32.xlu0 %v1604
    %v1606 = vpop.xlane.xlu0 %1605
    %v1607 = vmul.f32 %v1603, %v59
    %v1608 = vmul.f32 %v1606, %v59
    %v1609 = vadd.f32 %v1607, 1e-12
    %v1610 = vadd.f32 %v1608, 1e-12
    %v1611 = vrsqrt.pop %v1609
    %v1612 = vmul.f32 %v1611, %v1609
    %v1613 = vmul.f32 %v1612, %v1611
    %v1614 = vmul.f32 0.5, %v1613
    %v1615 = vsub.f32 1.5, %v1614
    %v1616 = vmul.f32 %v1611, %v1615
    %vm1617 = vweird.f32 %v1609
    %vm1618 = vweird.f32 %v1611
    %vm1619 = vmor %vm1617, %vm1618
    %v1620 = vsel %vm1619, %v1611, %v1616
    %v1621 = vrsqrt.pop %v1610
    %v1622 = vmul.f32 %v1621, %v1610
    %v1623 = vmul.f32 %v1622, %v1621
    %v1624 = vmul.f32 0.5, %v1623
    %v1625 = vsub.f32 1.5, %v1624
    %v1626 = vmul.f32 %v1621, %v1625
    %vm1627 = vweird.f32 %v1610
    %vm1628 = vweird.f32 %v1621
    %vm1629 = vmor %vm1627, %vm1628
    %v1630 = vsel %vm1629, %v1621, %v1626
    %v1631 = vmul.f32 %v1597, %v1620
    %v1632 = vmul.f32 %v1598, %v1630
    %v1633 = vperm.slane %v948, 1
    %v1634 = vmul.f32 %v1631, %v1633
    %v1635 = vmul.f32 %v1632, %v1633
    %v1636 = vperm.slane %v948, 2
    %v1637 = vadd.f32 %v1634, %v1636
    %v1638 = vadd.f32 %v1635, %v1636
    %s1639 = scalar_lea.vmem %s6, 32
    %v1640 = vld [vmem:[%s1639] sm:$0xff]
    %v1641 = vld [vmem:[%s1639 + $0x8] sm:$0xff]
    %v1642 = vld [vmem:[%s1639 + $0x10] sm:$0xff]
    %v1643 = vld [vmem:[%s1639 + $0x18] sm:$0xff]
    %s1644 = scalar_lea.vmem %s7, 1
    %v1645 = vld [vmem:[%s1644] sm:$0x1]
    %v1647 = vperm.slane %v1645, 0
    %v1650 = vsel %vm46, %v1637, 0
    %v1653 = vsel %vm46, %v1638, 0
    %1655 = vmatpush.msra.mxu0 0.0
    %1656 = vmatpush.msra.mxu0 0.0
    %1657 = vmatpush.msra.mxu0 0.0
    %1658 = vmatpush.msra.mxu0 0.0
    %1659 = vmatpush.msra.mxu0 0.0
    %1660 = vmatpush.msra.mxu0 0.0
    %1661 = vmatpush.msra.mxu0 0.0
    %1662 = vmatpush.msra.mxu0 0.0
    %1663 = vmatpush.msra.mxu0 0.0
    %1664 = vmatpush.msra.mxu0 0.0
    %1665 = vmatpush.msra.mxu0 0.0
    %1666 = vmatpush.msra.mxu0 0.0
    %1667 = vmatpush.msra.mxu0 %v1643
    %1668 = vmatpush.msra.mxu0 %v1642
    %1669 = vmatpush.msra.mxu0 %v1641
    %1670 = vmatpush.msra.mxu0 %v1640
    %1671 = vmatmul.f32.gmra.mxu0 %v1650
    %v1672 = vpop.f32.mrf.mxu0
    %v1673 = vadd.f32 %v1647, %v1672
    %1674 = vmatmul.f32.gmra.mxu0 %v1653
    %v1675 = vpop.f32.mrf.mxu0
    %v1676 = vadd.f32 %v1647, %v1675
    %1677 = vdwg.mxu0
    %v1678 = vmul.f32 %v1673, %v1673
    %v1679 = vmul.f32 %v1676, %v1676
    %v1680 = vmul.f32 %v1673, %v1678
    %v1681 = vmul.f32 %v1676, %v1679
    %v1682 = vmul.f32 %v1680, 0.044715
    %v1683 = vmul.f32 %v1681, 0.044715
    %v1684 = vadd.f32 %v1673, %v1682
    %v1685 = vadd.f32 %v1676, %v1683
    %v1686 = vmul.f32 %v1684, 0.7978846
    %v1687 = vmul.f32 %v1685, 0.7978846
    %v1688 = vtanh.pop %v1686
    %v1689 = vtanh.pop %v1687
    %v1690 = vadd.f32 %v1688, 1.0
    %v1691 = vadd.f32 %v1689, 1.0
    %v1692 = vmul.f32 %v1690, 0.5
    %v1693 = vmul.f32 %v1691, 0.5
    %v1694 = vmul.f32 %v1673, %v1692
    %v1695 = vmul.f32 %v1676, %v1693
    %s1696 = scalar_lea.vmem %s8, 64
    %v1697 = vld [vmem:[%s1696] sm:$0xff]
    %v1698 = vld [vmem:[%s1696 + $0x8] sm:$0xff]
    %v1699 = vld [vmem:[%s1696 + $0x10] sm:$0xff]
    %v1700 = vld [vmem:[%s1696 + $0x18] sm:$0xff]
    %v1701 = vld [vmem:[%s1696 + $0x20] sm:$0xff]
    %v1702 = vld [vmem:[%s1696 + $0x28] sm:$0xff]
    %v1703 = vld [vmem:[%s1696 + $0x30] sm:$0xff]
    %v1704 = vld [vmem:[%s1696 + $0x38] sm:$0xff]
    %v1705 = vperm.slane %v948, 3
    %v1707 = vsel %vm865, %v1694, 0
    %v1710 = vsel %vm865, %v1695, 0
    %1712 = vmatpush.msra.mxu0 0.0
    %1713 = vmatpush.msra.mxu0 0.0
    %1714 = vmatpush.msra.mxu0 0.0
    %1715 = vmatpush.msra.mxu0 0.0
    %1716 = vmatpush.msra.mxu0 0.0
    %1717 = vmatpush.msra.mxu0 0.0
    %1718 = vmatpush.msra.mxu0 0.0
    %1719 = vmatpush.msra.mxu0 0.0
    %1720 = vmatpush.msra.mxu0 %v1704
    %1721 = vmatpush.msra.mxu0 %v1703
    %1722 = vmatpush.msra.mxu0 %v1702
    %1723 = vmatpush.msra.mxu0 %v1701
    %1724 = vmatpush.msra.mxu0 %v1700
    %1725 = vmatpush.msra.mxu0 %v1699
    %1726 = vmatpush.msra.mxu0 %v1698
    %1727 = vmatpush.msra.mxu0 %v1697
    %1728 = vmatmul.f32.gmra.mxu0 %v1707
    %v1729 = vpop.f32.mrf.mxu0
    %v1730 = vadd.f32 %v1705, %v1729
    %1731 = vmatmul.f32.gmra.mxu0 %v1710
    %v1732 = vpop.f32.mrf.mxu0
    %v1733 = vadd.f32 %v1705, %v1732
    %1734 = vdwg.mxu0
    %v1735 = vadd.f32 %v1637, %v1730
    %v1736 = vadd.f32 %v1638, %v1733
    %v1737 = vsel %vm46, %v1735, 0.0
    %1738 = vadd.xlane.f32.xlu0 %v1737
    %v1739 = vpop.xlane.xlu0 %1738
    %v1740 = vsel %vm46, %v1736, 0.0
    %1741 = vadd.xlane.f32.xlu0 %v1740
    %v1742 = vpop.xlane.xlu0 %1741
    %v1743 = vmul.f32 %v1739, %v59
    %v1744 = vmul.f32 %v1742, %v59
    %v1745 = vsub.f32 %v1735, %v1743
    %v1746 = vsub.f32 %v1736, %v1744
    %v1747 = vmul.f32 %v1745, %v1745
    %v1748 = vmul.f32 %v1746, %v1746
    %v1749 = vsel %vm46, %v1747, 0.0
    %1750 = vadd.xlane.f32.xlu0 %v1749
    %v1751 = vpop.xlane.xlu0 %1750
    %v1752 = vsel %vm46, %v1748, 0.0
    %1753 = vadd.xlane.f32.xlu0 %v1752
    %v1754 = vpop.xlane.xlu0 %1753
    %v1755 = vmul.f32 %v1751, %v59
    %v1756 = vmul.f32 %v1754, %v59
    %v1757 = vadd.f32 %v1755, 1e-12
    %v1758 = vadd.f32 %v1756, 1e-12
    %v1759 = vrsqrt.pop %v1757
    %v1760 = vmul.f32 %v1759, %v1757
    %v1761 = vmul.f32 %v1760, %v1759
    %v1762 = vmul.f32 0.5, %v1761
    %v1763 = vsub.f32 1.5, %v1762
    %v1764 = vmul.f32 %v1759, %v1763
    %vm1765 = vweird.f32 %v1757
    %vm1766 = vweird.f32 %v1759
    %vm1767 = vmor %vm1765, %vm1766
    %v1768 = vsel %vm1767, %v1759, %v1764
    %v1769 = vrsqrt.pop %v1758
    %v1770 = vmul.f32 %v1769, %v1758
    %v1771 = vmul.f32 %v1770, %v1769
    %v1772 = vmul.f32 0.5, %v1771
    %v1773 = vsub.f32 1.5, %v1772
    %v1774 = vmul.f32 %v1769, %v1773
    %vm1775 = vweird.f32 %v1758
    %vm1776 = vweird.f32 %v1769
    %vm1777 = vmor %vm1775, %vm1776
    %v1778 = vsel %vm1777, %v1769, %v1774
    %v1779 = vmul.f32 %v1745, %v1768
    %v1780 = vmul.f32 %v1746, %v1778
    %v1781 = vperm.slane %v948, 4
    %v1782 = vmul.f32 %v1779, %v1781
    %v1783 = vmul.f32 %v1780, %v1781
    %v1784 = vperm.slane %v948, 5
    %v1785 = vadd.f32 %v1782, %v1784
    %v1786 = vadd.f32 %v1783, %v1784
    %v1788 = vrot.slane %v1786, 7
    %vm1790 = vcmask 1040384
    %v1791 = vsel %vm1790, %v1785, %v1788
    %vm1792 = vcmask 254976
    %1793 = vst.msk [vmem:[#allocation2] sm:$0x3] %vm1792, %v1791
    // Predicated region
    $region42: #{tpu_custom_call.1} parent=1 // pred_check
      _
    $region43: #{tpu_custom_call.1} parent=1 // pred_check_branch
      %1795 = sbr.rel (0) target = $region45
    $region44: #{tpu_custom_call.1} parent=1 // pred_region
      %1797 = vsyncadd [#allocation3], 0
      %s1799 = sshll.u32 [#allocation2], 4
      %s1800 = int_to_ptr.vmem [resolvable:$true] %s1799
      %s1801 = sshll.u32 %s10, 4
      %s1802 = int_to_ptr.hbm [resolvable:$true] %s1801
      %1804 = dma.vmem_to_hbm [thread:$0]  %s1800, 32, %s1802, [#allocation3]
    $region45: #{tpu_custom_call.1} parent=1 // pred_fallthru
      _
    // Predicated region
    $region46: #{tpu_custom_call.1} parent=1 // pred_check
      _
    $region47: #{tpu_custom_call.1} parent=1 // pred_check_branch
      %1806 = sbr.rel (0) target = $region49
    $region48: #{tpu_custom_call.1} parent=1 // pred_region
      %1808 = dma.done [#allocation3], 32
    $region49: #{tpu_custom_call.1} parent=1 // pred_fallthru
      _
    %1809 = vsyncpa [#allocation3], 1

</llo_original>
